<compile_context>
chip_gen: v7x
topology: tpu7x:2x2x1
jax: 0.10.0
libtpu: 0.0.40
codegen_flags: <defaults>
</compile_context>

<pallas_src>
import functools
import math

import jax
import jax.numpy as jnp
from jax.experimental import pallas as pl
from jax.experimental.pallas import tpu as pltpu


# ----------------------------- helpers (wrapper-side, parameter-only) ----------

def weight_norm_weight(v, g):
    """PyTorch weight_norm(dim=0) for Linear: W[i,:] = g[i] * v[i,:] / ||v[i,:]||."""
    norm = jnp.sqrt(jnp.sum(v * v, axis=1, keepdims=True))
    return v * (g[:, None] / norm)


def sinusoidal_pos_enc(seq_len, num_channels):
    """Matches GatedAttn.get_pos_enc."""
    position = jnp.arange(seq_len, dtype=jnp.float32)
    num_timescales = num_channels // 2
    log_timescale_increment = math.log(10000.0) / (num_timescales - 1)
    inv_timescales = jnp.exp(
        jnp.arange(num_timescales, dtype=jnp.float32) * -log_timescale_increment)
    scaled_time = position[:, None] * inv_timescales[None, :]
    enc = jnp.concatenate([jnp.sin(scaled_time), jnp.cos(scaled_time)], axis=1)
    if num_channels % 2:
        enc = jnp.pad(enc, ((0, 0), (0, num_channels % 2)))
    return enc  # (seq_len, num_channels)


# ----------------------------- fused Pallas kernel -----------------------------

def _gated_attn_kernel(x_ref, pos_ref, wk_ref, wv_ref, wq_ref,
                       wga_ref, wgb_ref, bga_ref, bgb_ref, o_ref,
                       *, num_heads, scale):
    # x_ref:   (1, S, C) VMEM block for the current batch element
    # pos_ref: (S, C)    positional encoding (shared across grid steps)
    # w*_ref:  (C, C)    projection weights, already transposed (x @ w)
    # b*_ref:  (1, C)    gate biases
    S, C = pos_ref.shape
    dh = C // num_heads

    x = x_ref[0] + pos_ref[...]                                       # (S, C)

    # in_proj (weight-normed, bias-free): columns [k | v | q] of the 3C output.
    k = jnp.dot(x, wk_ref[...], preferred_element_type=jnp.float32)   # (S, C)
    v = jnp.dot(x, wv_ref[...], preferred_element_type=jnp.float32)   # (S, C)
    q = jnp.dot(x, wq_ref[...], preferred_element_type=jnp.float32) * scale

    # Multi-head attention; heads occupy contiguous channel blocks.
    head_outs = []
    for hh in range(num_heads):
        sl = slice(hh * dh, (hh + 1) * dh)
        qh, kh, vh = q[:, sl], k[:, sl], v[:, sl]                      # (S, dh)
        s = jax.lax.dot_general(                                       # q @ k^T
            qh, kh, dimension_numbers=(((1,), (1,)), ((), ())),
            preferred_element_type=jnp.float32)                        # (S, S)
        s = s - jnp.max(s, axis=-1, keepdims=True)
        p = jnp.exp(s)
        p = p / jnp.sum(p, axis=-1, keepdims=True)
        head_outs.append(
            jnp.dot(p, vh, preferred_element_type=jnp.float32))        # (S, dh)
    attn = jnp.concatenate(head_outs, axis=-1)                         # (S, C)

    # Gate Linear (weight-normed, with bias) + GLU.
    a = jnp.dot(attn, wga_ref[...], preferred_element_type=jnp.float32) + bga_ref[...]
    g = jnp.dot(attn, wgb_ref[...], preferred_element_type=jnp.float32) + bgb_ref[...]
    o_ref[0] = (a * jax.nn.sigmoid(g)).astype(o_ref.dtype)


def gated_attn(x_bhwc, in_proj_v, in_proj_g, gate_v, gate_g, gate_b, *, num_heads):
    """Forward of GatedAttn. x_bhwc: (B, H, W, C); returns (B, H, W, C)."""
    b, h, w, c = x_bhwc.shape
    S = h * w
    dh = c // num_heads
    scale = dh ** -0.5

    # Effective (weight-normed) matrices, tiny parameter-only preprocessing.
    w_in = weight_norm_weight(in_proj_v, in_proj_g)      # (3C, C): rows [k|v|q]
    w_gate = weight_norm_weight(gate_v, gate_g)          # (2C, C): rows [a|b]

    # PyTorch Linear computes x @ W.T -> pre-transpose & split in the wrapper so
    # the kernel only does dense (C, C) matmuls (no in-kernel column slicing of 3C).
    wk_t = w_in[:c].T
    wv_t = w_in[c:2 * c].T
    wq_t = w_in[2 * c:].T
    wga_t = w_gate[:c].T
    wgb_t = w_gate[c:].T
    bga = gate_b[:c].reshape(1, c)
    bgb = gate_b[c:].reshape(1, c)

    pos = sinusoidal_pos_enc(S, c).astype(jnp.float32)
    x_seq = x_bhwc.reshape(b, S, c)

    kern = functools.partial(_gated_attn_kernel, num_heads=num_heads, scale=scale)

    out_seq = pl.pallas_call(
        kern,
        out_shape=jax.ShapeDtypeStruct((b, S, c), x_bhwc.dtype),
        grid=(b,),
        in_specs=[
            pl.BlockSpec((1, S, c), lambda i: (i, 0, 0)),   # x (per-batch tile)
            pl.BlockSpec((S, c), lambda i: (0, 0)),         # pos enc (shared)
            pl.BlockSpec((c, c), lambda i: (0, 0)),         # W_k^T
            pl.BlockSpec((c, c), lambda i: (0, 0)),         # W_v^T
            pl.BlockSpec((c, c), lambda i: (0, 0)),         # W_q^T
            pl.BlockSpec((c, c), lambda i: (0, 0)),         # W_gate_a^T
            pl.BlockSpec((c, c), lambda i: (0, 0)),         # W_gate_b^T
            pl.BlockSpec((1, c), lambda i: (0, 0)),         # bias_a
            pl.BlockSpec((1, c), lambda i: (0, 0)),         # bias_b
        ],
        out_specs=pl.BlockSpec((1, S, c), lambda i: (i, 0, 0)),
        compiler_params=pltpu.CompilerParams(
            dimension_semantics=("parallel",),              # batch split across TCs
            vmem_limit_bytes=32 * 1024 * 1024,
        ),
    )(x_seq, pos, wk_t, wv_t, wq_t, wga_t, wgb_t, bga, bgb)

    # (b, S, C) -> (b, h, w, C): the PyTorch transpose/view/permute chain is a reshape.
    return out_seq.reshape(b, h, w, c)


# ----------------------------- pure-JAX reference ------------------------------

def gated_attn_ref(x_bhwc, in_proj_v, in_proj_g, gate_v, gate_g, gate_b, *, num_heads):
    hp = jax.lax.Precision.HIGHEST
    b, h, w, c = x_bhwc.shape
    S = h * w
    dh = c // num_heads

    w_in = weight_norm_weight(in_proj_v, in_proj_g)
    w_gate = weight_norm_weight(gate_v, gate_g)

    x = x_bhwc.reshape(b, S, c) + sinusoidal_pos_enc(S, c)[None]
    proj = jnp.einsum('bsc,dc->bsd', x, w_in, precision=hp)           # (b, S, 3c)
    k, v, q = proj[..., :c], proj[..., c:2 * c], proj[..., 2 * c:]

    def split_heads(t):
        return t.reshape(b, S, num_heads, dh).transpose(0, 2, 1, 3)   # (b, H, S, dh)

    qh = split_heads(q) * dh ** -0.5
    kh = split_heads(k)
    vh = split_heads(v)
    scores = jnp.einsum('bhqd,bhkd->bhqk', qh, kh, precision=hp)
    weights = jax.nn.softmax(scores, axis=-1)
    attn = jnp.einsum('bhqk,bhkd->bhqd', weights, vh, precision=hp)
    attn = attn.transpose(0, 2, 1, 3).reshape(b, S, c)

    out = jnp.einsum('bsc,dc->bsd', attn, w_gate, precision=hp) + gate_b
    a, g = out[..., :c], out[..., c:]
    return (a * jax.nn.sigmoid(g)).reshape(b, h, w, c)


# ----------------------------- smoke test ---------------------------------------

if __name__ == "__main__":
    key = jax.random.PRNGKey(0)
    kx, k1, k2, k3, k4, k5 = jax.random.split(key, 6)

    B, H, W, C = 2, 4, 4, 32       # seq_len = 16, d_model = 32
    num_heads = 4

    x = jax.random.normal(kx, (B, H, W, C), dtype=jnp.float32)

    # weight_norm parameters: raw direction v and per-output-row gain g.
    in_proj_v = jax.random.normal(k1, (3 * C, C), dtype=jnp.float32)
    in_proj_g = 1.0 + 0.1 * jax.random.normal(k2, (3 * C,), dtype=jnp.float32)
    gate_v = jax.random.normal(k3, (2 * C, C), dtype=jnp.float32)
    gate_g = 1.0 + 0.1 * jax.random.normal(k4, (2 * C,), dtype=jnp.float32)
    gate_b = 0.1 * jax.random.normal(k5, (2 * C,), dtype=jnp.float32)

    out = gated_attn(x, in_proj_v, in_proj_g, gate_v, gate_g, gate_b,
                     num_heads=num_heads)
    jax.block_until_ready(out)

    ref = gated_attn_ref(x, in_proj_v, in_proj_g, gate_v, gate_g, gate_b,
                         num_heads=num_heads)

    assert out.shape == (B, H, W, C) and out.dtype == x.dtype
    max_err = float(jnp.max(jnp.abs(out - ref)))
    assert jnp.allclose(out, ref, atol=2e-2, rtol=2e-2), f"max abs err = {max_err}"

    print("KERNEL_OK")
</pallas_src>

<mosaic_0001>
module attributes {stable_mosaic.version = 11 : i64} {
  func.func @_gated_attn_kernel(%arg0: i32, %arg1: memref<1x16x32xf32, #tpu.memory_space<vmem>>, %arg2: memref<16x32xf32, #tpu.memory_space<vmem>>, %arg3: memref<32x32xf32, #tpu.memory_space<vmem>>, %arg4: memref<32x32xf32, #tpu.memory_space<vmem>>, %arg5: memref<32x32xf32, #tpu.memory_space<vmem>>, %arg6: memref<32x32xf32, #tpu.memory_space<vmem>>, %arg7: memref<32x32xf32, #tpu.memory_space<vmem>>, %arg8: memref<1x32xf32, #tpu.memory_space<vmem>>, %arg9: memref<1x32xf32, #tpu.memory_space<vmem>>, %arg10: memref<1x16x32xf32, #tpu.memory_space<vmem>>) attributes {dimension_semantics = [#tpu.dimension_semantics<parallel>], iteration_bounds = array<i64: 2>, scalar_prefetch = 0 : i64, scratch_operands = 0 : i64, tpu.core_type = #tpu.core_type<tc>, window_params = [{transform_indices = @transform_0, window_bounds = array<i64: 1, 16, 32>}, {pipeline_mode = #tpu.pipeline_mode<synchronous>, transform_indices = @transform_1, window_bounds = array<i64: 16, 32>}, {pipeline_mode = #tpu.pipeline_mode<synchronous>, transform_indices = @transform_2, window_bounds = array<i64: 32, 32>}, {pipeline_mode = #tpu.pipeline_mode<synchronous>, transform_indices = @transform_3, window_bounds = array<i64: 32, 32>}, {pipeline_mode = #tpu.pipeline_mode<synchronous>, transform_indices = @transform_4, window_bounds = array<i64: 32, 32>}, {pipeline_mode = #tpu.pipeline_mode<synchronous>, transform_indices = @transform_5, window_bounds = array<i64: 32, 32>}, {pipeline_mode = #tpu.pipeline_mode<synchronous>, transform_indices = @transform_6, window_bounds = array<i64: 32, 32>}, {pipeline_mode = #tpu.pipeline_mode<synchronous>, transform_indices = @transform_7, window_bounds = array<i64: 1, 32>}, {pipeline_mode = #tpu.pipeline_mode<synchronous>, transform_indices = @transform_8, window_bounds = array<i64: 1, 32>}, {transform_indices = @transform_9, window_bounds = array<i64: 1, 16, 32>}]} {
    %c0 = arith.constant 0 : index
    %c0_0 = arith.constant 0 : index
    %c0_1 = arith.constant 0 : index
    %0 = vector.load %arg1[%c0, %c0_0, %c0_1] : memref<1x16x32xf32, #tpu.memory_space<vmem>>, vector<1x16x32xf32>
    %1 = vector.shape_cast %0 : vector<1x16x32xf32> to vector<16x32xf32>
    %c0_2 = arith.constant 0 : index
    %c0_3 = arith.constant 0 : index
    %2 = vector.load %arg2[%c0_2, %c0_3] : memref<16x32xf32, #tpu.memory_space<vmem>>, vector<16x32xf32>
    %3 = arith.addf %1, %2 : vector<16x32xf32>
    %c0_4 = arith.constant 0 : index
    %c0_5 = arith.constant 0 : index
    %4 = vector.load %arg3[%c0_4, %c0_5] : memref<32x32xf32, #tpu.memory_space<vmem>>, vector<32x32xf32>
    %cst = arith.constant dense<0.000000e+00> : vector<16x32xf32>
    %5 = tpu.matmul %3, %4, %cst {dimension_numbers = #tpu.dot_dimension_numbers<[1], [0], [0], [1], [0, 0, 1, 1], [], []>} : vector<16x32xf32>, vector<32x32xf32>, vector<16x32xf32> -> vector<16x32xf32>
    %c0_6 = arith.constant 0 : index
    %c0_7 = arith.constant 0 : index
    %6 = vector.load %arg4[%c0_6, %c0_7] : memref<32x32xf32, #tpu.memory_space<vmem>>, vector<32x32xf32>
    %cst_8 = arith.constant dense<0.000000e+00> : vector<16x32xf32>
    %7 = tpu.matmul %3, %6, %cst_8 {dimension_numbers = #tpu.dot_dimension_numbers<[1], [0], [0], [1], [0, 0, 1, 1], [], []>} : vector<16x32xf32>, vector<32x32xf32>, vector<16x32xf32> -> vector<16x32xf32>
    %c0_9 = arith.constant 0 : index
    %c0_10 = arith.constant 0 : index
    %8 = vector.load %arg5[%c0_9, %c0_10] : memref<32x32xf32, #tpu.memory_space<vmem>>, vector<32x32xf32>
    %cst_11 = arith.constant dense<0.000000e+00> : vector<16x32xf32>
    %9 = tpu.matmul %3, %8, %cst_11 {dimension_numbers = #tpu.dot_dimension_numbers<[1], [0], [0], [1], [0, 0, 1, 1], [], []>} : vector<16x32xf32>, vector<32x32xf32>, vector<16x32xf32> -> vector<16x32xf32>
    %cst_12 = arith.constant 0.353553385 : f32
    %10 = vector.broadcast %cst_12 : f32 to vector<16x32xf32>
    %11 = arith.mulf %9, %10 : vector<16x32xf32>
    %12 = vector.extract_strided_slice %11 {offsets = [0, 0], sizes = [16, 8], strides = [1, 1]} : vector<16x32xf32> to vector<16x8xf32>
    %13 = vector.extract_strided_slice %5 {offsets = [0, 0], sizes = [16, 8], strides = [1, 1]} : vector<16x32xf32> to vector<16x8xf32>
    %14 = vector.extract_strided_slice %7 {offsets = [0, 0], sizes = [16, 8], strides = [1, 1]} : vector<16x32xf32> to vector<16x8xf32>
    %cst_13 = arith.constant dense<0.000000e+00> : vector<16x16xf32>
    %15 = tpu.matmul %12, %13, %cst_13 {dimension_numbers = #tpu.dot_dimension_numbers<[1], [1], [0], [0], [0, 0, 1, 0], [], []>} : vector<16x8xf32>, vector<16x8xf32>, vector<16x16xf32> -> vector<16x16xf32>
    %cst_14 = arith.constant dense<0xFF800000> : vector<16xf32>
    %16 = vector.multi_reduction <maximumf>, %15, %cst_14 [1] : vector<16x16xf32> to vector<16xf32>
    %17 = vector.shape_cast %16 : vector<16xf32> to vector<16x1xf32>
    %18 = vector.broadcast %17 : vector<16x1xf32> to vector<16x16xf32>
    %19 = arith.subf %15, %18 : vector<16x16xf32>
    %20 = math.exp %19 : vector<16x16xf32>
    %cst_15 = arith.constant dense<0.000000e+00> : vector<16xf32>
    %21 = vector.multi_reduction <add>, %20, %cst_15 [1] : vector<16x16xf32> to vector<16xf32>
    %22 = vector.shape_cast %21 : vector<16xf32> to vector<16x1xf32>
    %23 = vector.broadcast %22 : vector<16x1xf32> to vector<16x16xf32>
    %24 = arith.divf %20, %23 : vector<16x16xf32>
    %cst_16 = arith.constant dense<0.000000e+00> : vector<16x8xf32>
    %25 = tpu.matmul %24, %14, %cst_16 {dimension_numbers = #tpu.dot_dimension_numbers<[1], [0], [0], [1], [0, 0, 1, 1], [], []>} : vector<16x16xf32>, vector<16x8xf32>, vector<16x8xf32> -> vector<16x8xf32>
    %26 = vector.extract_strided_slice %11 {offsets = [0, 8], sizes = [16, 8], strides = [1, 1]} : vector<16x32xf32> to vector<16x8xf32>
    %27 = vector.extract_strided_slice %5 {offsets = [0, 8], sizes = [16, 8], strides = [1, 1]} : vector<16x32xf32> to vector<16x8xf32>
    %28 = vector.extract_strided_slice %7 {offsets = [0, 8], sizes = [16, 8], strides = [1, 1]} : vector<16x32xf32> to vector<16x8xf32>
    %cst_17 = arith.constant dense<0.000000e+00> : vector<16x16xf32>
    %29 = tpu.matmul %26, %27, %cst_17 {dimension_numbers = #tpu.dot_dimension_numbers<[1], [1], [0], [0], [0, 0, 1, 0], [], []>} : vector<16x8xf32>, vector<16x8xf32>, vector<16x16xf32> -> vector<16x16xf32>
    %cst_18 = arith.constant dense<0xFF800000> : vector<16xf32>
    %30 = vector.multi_reduction <maximumf>, %29, %cst_18 [1] : vector<16x16xf32> to vector<16xf32>
    %31 = vector.shape_cast %30 : vector<16xf32> to vector<16x1xf32>
    %32 = vector.broadcast %31 : vector<16x1xf32> to vector<16x16xf32>
    %33 = arith.subf %29, %32 : vector<16x16xf32>
    %34 = math.exp %33 : vector<16x16xf32>
    %cst_19 = arith.constant dense<0.000000e+00> : vector<16xf32>
    %35 = vector.multi_reduction <add>, %34, %cst_19 [1] : vector<16x16xf32> to vector<16xf32>
    %36 = vector.shape_cast %35 : vector<16xf32> to vector<16x1xf32>
    %37 = vector.broadcast %36 : vector<16x1xf32> to vector<16x16xf32>
    %38 = arith.divf %34, %37 : vector<16x16xf32>
    %cst_20 = arith.constant dense<0.000000e+00> : vector<16x8xf32>
    %39 = tpu.matmul %38, %28, %cst_20 {dimension_numbers = #tpu.dot_dimension_numbers<[1], [0], [0], [1], [0, 0, 1, 1], [], []>} : vector<16x16xf32>, vector<16x8xf32>, vector<16x8xf32> -> vector<16x8xf32>
    %40 = vector.extract_strided_slice %11 {offsets = [0, 16], sizes = [16, 8], strides = [1, 1]} : vector<16x32xf32> to vector<16x8xf32>
    %41 = vector.extract_strided_slice %5 {offsets = [0, 16], sizes = [16, 8], strides = [1, 1]} : vector<16x32xf32> to vector<16x8xf32>
    %42 = vector.extract_strided_slice %7 {offsets = [0, 16], sizes = [16, 8], strides = [1, 1]} : vector<16x32xf32> to vector<16x8xf32>
    %cst_21 = arith.constant dense<0.000000e+00> : vector<16x16xf32>
    %43 = tpu.matmul %40, %41, %cst_21 {dimension_numbers = #tpu.dot_dimension_numbers<[1], [1], [0], [0], [0, 0, 1, 0], [], []>} : vector<16x8xf32>, vector<16x8xf32>, vector<16x16xf32> -> vector<16x16xf32>
    %cst_22 = arith.constant dense<0xFF800000> : vector<16xf32>
    %44 = vector.multi_reduction <maximumf>, %43, %cst_22 [1] : vector<16x16xf32> to vector<16xf32>
    %45 = vector.shape_cast %44 : vector<16xf32> to vector<16x1xf32>
    %46 = vector.broadcast %45 : vector<16x1xf32> to vector<16x16xf32>
    %47 = arith.subf %43, %46 : vector<16x16xf32>
    %48 = math.exp %47 : vector<16x16xf32>
    %cst_23 = arith.constant dense<0.000000e+00> : vector<16xf32>
    %49 = vector.multi_reduction <add>, %48, %cst_23 [1] : vector<16x16xf32> to vector<16xf32>
    %50 = vector.shape_cast %49 : vector<16xf32> to vector<16x1xf32>
    %51 = vector.broadcast %50 : vector<16x1xf32> to vector<16x16xf32>
    %52 = arith.divf %48, %51 : vector<16x16xf32>
    %cst_24 = arith.constant dense<0.000000e+00> : vector<16x8xf32>
    %53 = tpu.matmul %52, %42, %cst_24 {dimension_numbers = #tpu.dot_dimension_numbers<[1], [0], [0], [1], [0, 0, 1, 1], [], []>} : vector<16x16xf32>, vector<16x8xf32>, vector<16x8xf32> -> vector<16x8xf32>
    %54 = vector.extract_strided_slice %11 {offsets = [0, 24], sizes = [16, 8], strides = [1, 1]} : vector<16x32xf32> to vector<16x8xf32>
    %55 = vector.extract_strided_slice %5 {offsets = [0, 24], sizes = [16, 8], strides = [1, 1]} : vector<16x32xf32> to vector<16x8xf32>
    %56 = vector.extract_strided_slice %7 {offsets = [0, 24], sizes = [16, 8], strides = [1, 1]} : vector<16x32xf32> to vector<16x8xf32>
    %cst_25 = arith.constant dense<0.000000e+00> : vector<16x16xf32>
    %57 = tpu.matmul %54, %55, %cst_25 {dimension_numbers = #tpu.dot_dimension_numbers<[1], [1], [0], [0], [0, 0, 1, 0], [], []>} : vector<16x8xf32>, vector<16x8xf32>, vector<16x16xf32> -> vector<16x16xf32>
    %cst_26 = arith.constant dense<0xFF800000> : vector<16xf32>
    %58 = vector.multi_reduction <maximumf>, %57, %cst_26 [1] : vector<16x16xf32> to vector<16xf32>
    %59 = vector.shape_cast %58 : vector<16xf32> to vector<16x1xf32>
    %60 = vector.broadcast %59 : vector<16x1xf32> to vector<16x16xf32>
    %61 = arith.subf %57, %60 : vector<16x16xf32>
    %62 = math.exp %61 : vector<16x16xf32>
    %cst_27 = arith.constant dense<0.000000e+00> : vector<16xf32>
    %63 = vector.multi_reduction <add>, %62, %cst_27 [1] : vector<16x16xf32> to vector<16xf32>
    %64 = vector.shape_cast %63 : vector<16xf32> to vector<16x1xf32>
    %65 = vector.broadcast %64 : vector<16x1xf32> to vector<16x16xf32>
    %66 = arith.divf %62, %65 : vector<16x16xf32>
    %cst_28 = arith.constant dense<0.000000e+00> : vector<16x8xf32>
    %67 = tpu.matmul %66, %56, %cst_28 {dimension_numbers = #tpu.dot_dimension_numbers<[1], [0], [0], [1], [0, 0, 1, 1], [], []>} : vector<16x16xf32>, vector<16x8xf32>, vector<16x8xf32> -> vector<16x8xf32>
    %68 = tpu.concatenate %25, %39, %53, %67 in 1 : vector<16x8xf32>, vector<16x8xf32>, vector<16x8xf32>, vector<16x8xf32> -> vector<16x32xf32>
    %c0_29 = arith.constant 0 : index
    %c0_30 = arith.constant 0 : index
    %69 = vector.load %arg6[%c0_29, %c0_30] : memref<32x32xf32, #tpu.memory_space<vmem>>, vector<32x32xf32>
    %cst_31 = arith.constant dense<0.000000e+00> : vector<16x32xf32>
    %70 = tpu.matmul %68, %69, %cst_31 {dimension_numbers = #tpu.dot_dimension_numbers<[1], [0], [0], [1], [0, 0, 1, 1], [], []>} : vector<16x32xf32>, vector<32x32xf32>, vector<16x32xf32> -> vector<16x32xf32>
    %c0_32 = arith.constant 0 : index
    %c0_33 = arith.constant 0 : index
    %71 = vector.load %arg8[%c0_32, %c0_33] : memref<1x32xf32, #tpu.memory_space<vmem>>, vector<1x32xf32>
    %72 = vector.broadcast %71 : vector<1x32xf32> to vector<16x32xf32>
    %73 = arith.addf %70, %72 : vector<16x32xf32>
    %c0_34 = arith.constant 0 : index
    %c0_35 = arith.constant 0 : index
    %74 = vector.load %arg7[%c0_34, %c0_35] : memref<32x32xf32, #tpu.memory_space<vmem>>, vector<32x32xf32>
    %cst_36 = arith.constant dense<0.000000e+00> : vector<16x32xf32>
    %75 = tpu.matmul %68, %74, %cst_36 {dimension_numbers = #tpu.dot_dimension_numbers<[1], [0], [0], [1], [0, 0, 1, 1], [], []>} : vector<16x32xf32>, vector<32x32xf32>, vector<16x32xf32> -> vector<16x32xf32>
    %c0_37 = arith.constant 0 : index
    %c0_38 = arith.constant 0 : index
    %76 = vector.load %arg9[%c0_37, %c0_38] : memref<1x32xf32, #tpu.memory_space<vmem>>, vector<1x32xf32>
    %77 = vector.broadcast %76 : vector<1x32xf32> to vector<16x32xf32>
    %78 = arith.addf %75, %77 : vector<16x32xf32>
    %79 = arith.negf %78 : vector<16x32xf32>
    %80 = math.exp %79 : vector<16x32xf32>
    %cst_39 = arith.constant 1.000000e+00 : f32
    %81 = vector.broadcast %cst_39 : f32 to vector<16x32xf32>
    %82 = arith.addf %81, %80 : vector<16x32xf32>
    %83 = arith.divf %81, %82 : vector<16x32xf32>
    %84 = arith.mulf %73, %83 : vector<16x32xf32>
    %c0_40 = arith.constant 0 : index
    %c0_41 = arith.constant 0 : index
    %c0_42 = arith.constant 0 : index
    %85 = vector.load %arg10[%c0_40, %c0_41, %c0_42] : memref<1x16x32xf32, #tpu.memory_space<vmem>>, vector<1x16x32xf32>
    %86 = vector.shape_cast %85 : vector<1x16x32xf32> to vector<16x32xf32>
    %87 = vector.shape_cast %84 : vector<16x32xf32> to vector<1x16x32xf32>
    tpu.vector_store %arg10[%c0_40, %c0_41, %c0_42], %87 {strides = array<i32>} : memref<1x16x32xf32, #tpu.memory_space<vmem>>, vector<1x16x32xf32>,
    return
  }
  func.func @transform_0(%arg0: i32) -> (i32, i32, i32) {
    %c0_i32 = arith.constant 0 : i32
    %c0_i32_0 = arith.constant 0 : i32
    %c0_i32_1 = arith.constant 0 : i32
    return %arg0, %c0_i32, %c0_i32_0 : i32, i32, i32
  }
  func.func @transform_1(%arg0: i32) -> (i32, i32) {
    %c0_i32 = arith.constant 0 : i32
    %c0_i32_0 = arith.constant 0 : i32
    %c0_i32_1 = arith.constant 0 : i32
    return %c0_i32, %c0_i32_0 : i32, i32
  }
  func.func @transform_2(%arg0: i32) -> (i32, i32) {
    %c0_i32 = arith.constant 0 : i32
    %c0_i32_0 = arith.constant 0 : i32
    %c0_i32_1 = arith.constant 0 : i32
    return %c0_i32, %c0_i32_0 : i32, i32
  }
  func.func @transform_3(%arg0: i32) -> (i32, i32) {
    %c0_i32 = arith.constant 0 : i32
    %c0_i32_0 = arith.constant 0 : i32
    %c0_i32_1 = arith.constant 0 : i32
    return %c0_i32, %c0_i32_0 : i32, i32
  }
  func.func @transform_4(%arg0: i32) -> (i32, i32) {
    %c0_i32 = arith.constant 0 : i32
    %c0_i32_0 = arith.constant 0 : i32
    %c0_i32_1 = arith.constant 0 : i32
    return %c0_i32, %c0_i32_0 : i32, i32
  }
  func.func @transform_5(%arg0: i32) -> (i32, i32) {
    %c0_i32 = arith.constant 0 : i32
    %c0_i32_0 = arith.constant 0 : i32
    %c0_i32_1 = arith.constant 0 : i32
    return %c0_i32, %c0_i32_0 : i32, i32
  }
  func.func @transform_6(%arg0: i32) -> (i32, i32) {
    %c0_i32 = arith.constant 0 : i32
    %c0_i32_0 = arith.constant 0 : i32
    %c0_i32_1 = arith.constant 0 : i32
    return %c0_i32, %c0_i32_0 : i32, i32
  }
  func.func @transform_7(%arg0: i32) -> (i32, i32) {
    %c0_i32 = arith.constant 0 : i32
    %c0_i32_0 = arith.constant 0 : i32
    %c0_i32_1 = arith.constant 0 : i32
    return %c0_i32, %c0_i32_0 : i32, i32
  }
  func.func @transform_8(%arg0: i32) -> (i32, i32) {
    %c0_i32 = arith.constant 0 : i32
    %c0_i32_0 = arith.constant 0 : i32
    %c0_i32_1 = arith.constant 0 : i32
    return %c0_i32, %c0_i32_0 : i32, i32
  }
  func.func @transform_9(%arg0: i32) -> (i32, i32, i32) {
    %c0_i32 = arith.constant 0 : i32
    %c0_i32_0 = arith.constant 0 : i32
    %c0_i32_1 = arith.constant 0 : i32
    return %arg0, %c0_i32, %c0_i32_0 : i32, i32, i32
  }
}

</mosaic_0001>

<llo_original>
// kernel: tpu_custom_call.1
$region0: #{tpu_custom_call.1}
  #allocation0 [shape = 'u32[]', space=smem, size = 0x4, offset = 0x4, fixed_abs, tag = 'smem constant byte address 0x4 - core index']
  #allocation1 [shape = 'u32[144,128]{1,0:T(1,128)}', space=vmem, size = 0x12000, scoped, tag = 'internal scratch']
  %s0 = inlined_call_operand.hbm [shape: f32[2,16,32], index: 0, kind: input, shape index: {}]
  %s1 = inlined_call_operand.hbm [shape: f32[16,32], index: 1, kind: input, shape index: {}]
  %s2 = inlined_call_operand.hbm [shape: f32[32,32], index: 2, kind: input, shape index: {}]
  %s3 = inlined_call_operand.hbm [shape: f32[32,32], index: 3, kind: input, shape index: {}]
  %s4 = inlined_call_operand.hbm [shape: f32[32,32], index: 4, kind: input, shape index: {}]
  %s5 = inlined_call_operand.hbm [shape: f32[32,32], index: 5, kind: input, shape index: {}]
  %s6 = inlined_call_operand.hbm [shape: f32[32,32], index: 6, kind: input, shape index: {}]
  %s7 = inlined_call_operand.vmem [shape: f32[1,32], index: 7, kind: input, shape index: {}]
  %s8 = inlined_call_operand.vmem [shape: f32[1,32], index: 8, kind: input, shape index: {}]
  %s9 = inlined_call_operand.hbm [shape: f32[2,16,32], index: 9, kind: output, shape index: {}]
  %s10 = sld [smem:[#allocation0]]
  $region97: #{tpu_custom_call.1} parent=0
    _
  %s12 = ssub.s32 1, %s10
  %s13 = scalar_select 0, %s12, %s10
  $region1: #{tpu_custom_call.1} parent=0
    #allocation2 [shape = 'u8[16384]{0}', space=vmem, size = 0x4000, scoped, tag = 'input window, operand 0']
    #allocation3 [shape = 's32[2]{0}', space=sflag, size = 0x8, scoped, tag = 'scoped memory for tpu_custom_call.1']
    #allocation4 [shape = 's32[2]{0}', space=sflag, size = 0x8, scoped, tag = 'scoped memory for tpu_custom_call.1']
    #allocation5 [shape = 'u8[8192]{0}', space=vmem, size = 0x2000, scoped, tag = 'input window, operand 1, single buffered']
    #allocation6 [shape = 's32[1]{0}', space=sflag, size = 0x4, scoped, tag = 'scoped memory for tpu_custom_call.1']
    #allocation7 [shape = 'u8[16384]{0}', space=vmem, size = 0x4000, scoped, tag = 'input window, operand 2, single buffered']
    #allocation8 [shape = 'u8[16384]{0}', space=vmem, size = 0x4000, scoped, tag = 'input window, operand 3, single buffered']
    #allocation9 [shape = 's32[1]{0}', space=sflag, size = 0x4, scoped, tag = 'scoped memory for tpu_custom_call.1']
    #allocation10 [shape = 'u8[16384]{0}', space=vmem, size = 0x4000, scoped, tag = 'input window, operand 4, single buffered']
    #allocation11 [shape = 'u8[16384]{0}', space=vmem, size = 0x4000, scoped, tag = 'input window, operand 5, single buffered']
    #allocation12 [shape = 's32[1]{0}', space=sflag, size = 0x4, scoped, tag = 'scoped memory for tpu_custom_call.1']
    #allocation13 [shape = 'u8[16384]{0}', space=vmem, size = 0x4000, scoped, tag = 'input window, operand 6, single buffered']
    #allocation14 [shape = 'u8[16384]{0}', space=vmem, size = 0x4000, scoped, tag = 'output window, operand 0']
    %14 = vsyncpa [#allocation3], 0
    %s15 = scalar_lea.sflag [#allocation3], 1
    %16 = vsyncpa %s15, 0
    %17 = vsyncpa [#allocation6], 0
    %18 = vsyncpa [#allocation9], 0
    %19 = vsyncpa [#allocation12], 0
    %20 = vsyncpa [#allocation4], 0
    %s21 = scalar_lea.sflag [#allocation4], 1
    %22 = vsyncpa %s21, 0
    loop: start=0, step=1, limit=4
    $region2: #{tpu_custom_call.1} parent=1 // loop_pre_header
      _
    $region3: #{tpu_custom_call.1} parent=1 // loop_header
      %s24 = sphi 0, %s28
      %p25 = scmp.ge.s32.totalorder %s24, 4
      %s34 = sphi 0, %s36
      %s37 = sphi 0, %s34
      %s38 = sphi 0, %s37
      %s54 = sphi 0, %s38
      %s58 = sphi 0, %s58
      %s60 = sphi 0, %s58
      %s61 = sphi 0, %s60
      %s75 = sphi 0, %s61
      %s79 = sphi 0, %s79
      %s81 = sphi 0, %s79
      %s82 = sphi 0, %s81
      %s96 = sphi 0, %s82
      %s100 = sphi 0, %s100
      %s102 = sphi 0, %s100
      %s103 = sphi 0, %s102
      %s117 = sphi 0, %s103
      %s121 = sphi 0, %s121
      %s123 = sphi 0, %s121
      %s124 = sphi 0, %s123
      %s138 = sphi 0, %s124
      %s142 = sphi 0, %s142
      %s144 = sphi 0, %s142
      %s145 = sphi 0, %s144
      %s159 = sphi 0, %s145
      %s163 = sphi 0, %s163
      %s165 = sphi 0, %s163
      %s166 = sphi 0, %s165
      %s180 = sphi 0, %s166
      %s184 = sphi 0, %s184
      %s186 = sphi 0, %s184
      %s187 = sphi 0, %s186
      %s201 = sphi 0, %s187
      %s205 = sphi 0, %s205
      %s207 = sphi 0, %s205
      %s208 = sphi 0, %s207
      %s222 = sphi 0, %s208
      %s228 = sphi 0, %s230
      %s231 = sphi 0, %s228
      %s232 = sphi 0, %s231
      %s248 = sphi 0, %s232
    $region4: #{tpu_custom_call.1} parent=1 // loop_header_branch
      %27 = sbr.rel (%p25) target = $region8
    $region5: #{tpu_custom_call.1} parent=1 // loop_body
      %s29 = ssub.s32 %s24, 1
      %s30 = ssub.s32 %s24, 2
      %s31 = sadd.s32 %s24, 1
      %s32 = ssub.s32 %s24, %s31
      %p33 = scmp.eq.s32.totalorder %s32, 0
      %s35 = sadd.s32 %s34, 1
      %s36 = scalar_select %p33, %s34, %s35
      %p39 = pneg %p33
      %p40 = scmp.eq.s32.totalorder %s24, 1
      %p41 = por %p39, %p40
      %p42 = scmp.ne.s32.totalorder %s34, %s37
      %p43 = scmp.eq.s32.totalorder %s24, 0
      %p44 = por %p42, %p43
      %p45 = scmp.ne.s32.totalorder %s34, %s37
      %p46 = scmp.eq.s32.totalorder %s29, 1
      %p47 = por %p45, %p46
      %p48 = scmp.ne.s32.totalorder %s37, %s38
      %p49 = scmp.eq.s32.totalorder %s29, 0
      %p50 = por %p48, %p49
      %p51 = scmp.ne.s32.totalorder %s37, %s38
      %p52 = scmp.eq.s32.totalorder %s30, 1
      %p53 = por %p51, %p52
      %p55 = scmp.ne.s32.totalorder %s38, %s54
      %p56 = scmp.eq.s32.totalorder %s30, 0
      %p57 = por %p55, %p56
      %s59 = sadd.s32 %s58, 1
      %p62 = scmp.eq.s32.totalorder %s24, 1
      %p63 = scmp.ne.s32.totalorder %s58, %s60
      %p64 = scmp.eq.s32.totalorder %s24, 0
      %p65 = por %p63, %p64
      %p66 = scmp.ne.s32.totalorder %s58, %s60
      %p67 = scmp.eq.s32.totalorder %s29, 1
      %p68 = por %p66, %p67
      %p69 = scmp.ne.s32.totalorder %s60, %s61
      %p70 = scmp.eq.s32.totalorder %s29, 0
      %p71 = por %p69, %p70
      %p72 = scmp.ne.s32.totalorder %s60, %s61
      %p73 = scmp.eq.s32.totalorder %s30, 1
      %p74 = por %p72, %p73
      %p76 = scmp.ne.s32.totalorder %s61, %s75
      %p77 = scmp.eq.s32.totalorder %s30, 0
      %p78 = por %p76, %p77
      %s80 = sadd.s32 %s79, 1
      %p83 = scmp.eq.s32.totalorder %s24, 1
      %p84 = scmp.ne.s32.totalorder %s79, %s81
      %p85 = scmp.eq.s32.totalorder %s24, 0
      %p86 = por %p84, %p85
      %p87 = scmp.ne.s32.totalorder %s79, %s81
      %p88 = scmp.eq.s32.totalorder %s29, 1
      %p89 = por %p87, %p88
      %p90 = scmp.ne.s32.totalorder %s81, %s82
      %p91 = scmp.eq.s32.totalorder %s29, 0
      %p92 = por %p90, %p91
      %p93 = scmp.ne.s32.totalorder %s81, %s82
      %p94 = scmp.eq.s32.totalorder %s30, 1
      %p95 = por %p93, %p94
      %p97 = scmp.ne.s32.totalorder %s82, %s96
      %p98 = scmp.eq.s32.totalorder %s30, 0
      %p99 = por %p97, %p98
      %s101 = sadd.s32 %s100, 1
      %p104 = scmp.eq.s32.totalorder %s24, 1
      %p105 = scmp.ne.s32.totalorder %s100, %s102
      %p106 = scmp.eq.s32.totalorder %s24, 0
      %p107 = por %p105, %p106
      %p108 = scmp.ne.s32.totalorder %s100, %s102
      %p109 = scmp.eq.s32.totalorder %s29, 1
      %p110 = por %p108, %p109
      %p111 = scmp.ne.s32.totalorder %s102, %s103
      %p112 = scmp.eq.s32.totalorder %s29, 0
      %p113 = por %p111, %p112
      %p114 = scmp.ne.s32.totalorder %s102, %s103
      %p115 = scmp.eq.s32.totalorder %s30, 1
      %p116 = por %p114, %p115
      %p118 = scmp.ne.s32.totalorder %s103, %s117
      %p119 = scmp.eq.s32.totalorder %s30, 0
      %p120 = por %p118, %p119
      %s122 = sadd.s32 %s121, 1
      %p125 = scmp.eq.s32.totalorder %s24, 1
      %p126 = scmp.ne.s32.totalorder %s121, %s123
      %p127 = scmp.eq.s32.totalorder %s24, 0
      %p128 = por %p126, %p127
      %p129 = scmp.ne.s32.totalorder %s121, %s123
      %p130 = scmp.eq.s32.totalorder %s29, 1
      %p131 = por %p129, %p130
      %p132 = scmp.ne.s32.totalorder %s123, %s124
      %p133 = scmp.eq.s32.totalorder %s29, 0
      %p134 = por %p132, %p133
      %p135 = scmp.ne.s32.totalorder %s123, %s124
      %p136 = scmp.eq.s32.totalorder %s30, 1
      %p137 = por %p135, %p136
      %p139 = scmp.ne.s32.totalorder %s124, %s138
      %p140 = scmp.eq.s32.totalorder %s30, 0
      %p141 = por %p139, %p140
      %s143 = sadd.s32 %s142, 1
      %p146 = scmp.eq.s32.totalorder %s24, 1
      %p147 = scmp.ne.s32.totalorder %s142, %s144
      %p148 = scmp.eq.s32.totalorder %s24, 0
      %p149 = por %p147, %p148
      %p150 = scmp.ne.s32.totalorder %s142, %s144
      %p151 = scmp.eq.s32.totalorder %s29, 1
      %p152 = por %p150, %p151
      %p153 = scmp.ne.s32.totalorder %s144, %s145
      %p154 = scmp.eq.s32.totalorder %s29, 0
      %p155 = por %p153, %p154
      %p156 = scmp.ne.s32.totalorder %s144, %s145
      %p157 = scmp.eq.s32.totalorder %s30, 1
      %p158 = por %p156, %p157
      %p160 = scmp.ne.s32.totalorder %s145, %s159
      %p161 = scmp.eq.s32.totalorder %s30, 0
      %p162 = por %p160, %p161
      %s164 = sadd.s32 %s163, 1
      %p167 = scmp.eq.s32.totalorder %s24, 1
      %p168 = scmp.ne.s32.totalorder %s163, %s165
      %p169 = scmp.eq.s32.totalorder %s24, 0
      %p170 = por %p168, %p169
      %p171 = scmp.ne.s32.totalorder %s163, %s165
      %p172 = scmp.eq.s32.totalorder %s29, 1
      %p173 = por %p171, %p172
      %p174 = scmp.ne.s32.totalorder %s165, %s166
      %p175 = scmp.eq.s32.totalorder %s29, 0
      %p176 = por %p174, %p175
      %p177 = scmp.ne.s32.totalorder %s165, %s166
      %p178 = scmp.eq.s32.totalorder %s30, 1
      %p179 = por %p177, %p178
      %p181 = scmp.ne.s32.totalorder %s166, %s180
      %p182 = scmp.eq.s32.totalorder %s30, 0
      %p183 = por %p181, %p182
      %s185 = sadd.s32 %s184, 1
      %p188 = scmp.eq.s32.totalorder %s24, 1
      %p189 = scmp.ne.s32.totalorder %s184, %s186
      %p190 = scmp.eq.s32.totalorder %s24, 0
      %p191 = por %p189, %p190
      %p192 = scmp.ne.s32.totalorder %s184, %s186
      %p193 = scmp.eq.s32.totalorder %s29, 1
      %p194 = por %p192, %p193
      %p195 = scmp.ne.s32.totalorder %s186, %s187
      %p196 = scmp.eq.s32.totalorder %s29, 0
      %p197 = por %p195, %p196
      %p198 = scmp.ne.s32.totalorder %s186, %s187
      %p199 = scmp.eq.s32.totalorder %s30, 1
      %p200 = por %p198, %p199
      %p202 = scmp.ne.s32.totalorder %s187, %s201
      %p203 = scmp.eq.s32.totalorder %s30, 0
      %p204 = por %p202, %p203
      %s206 = sadd.s32 %s205, 1
      %p209 = scmp.eq.s32.totalorder %s24, 1
      %p210 = scmp.ne.s32.totalorder %s205, %s207
      %p211 = scmp.eq.s32.totalorder %s24, 0
      %p212 = por %p210, %p211
      %p213 = scmp.ne.s32.totalorder %s205, %s207
      %p214 = scmp.eq.s32.totalorder %s29, 1
      %p215 = por %p213, %p214
      %p216 = scmp.ne.s32.totalorder %s207, %s208
      %p217 = scmp.eq.s32.totalorder %s29, 0
      %p218 = por %p216, %p217
      %p219 = scmp.ne.s32.totalorder %s207, %s208
      %p220 = scmp.eq.s32.totalorder %s30, 1
      %p221 = por %p219, %p220
      %p223 = scmp.ne.s32.totalorder %s208, %s222
      %p224 = scmp.eq.s32.totalorder %s30, 0
      %p225 = por %p223, %p224
      %s226 = ssub.s32 %s24, %s31
      %p227 = scmp.eq.s32.totalorder %s226, 0
      %s229 = sadd.s32 %s228, 1
      %s230 = scalar_select %p227, %s228, %s229
      %p233 = pneg %p227
      %p234 = scmp.eq.s32.totalorder %s24, 1
      %p235 = por %p233, %p234
      %p236 = scmp.ne.s32.totalorder %s228, %s231
      %p237 = scmp.eq.s32.totalorder %s24, 0
      %p238 = por %p236, %p237
      %p239 = scmp.ne.s32.totalorder %s228, %s231
      %p240 = scmp.eq.s32.totalorder %s29, 1
      %p241 = por %p239, %p240
      %p242 = scmp.ne.s32.totalorder %s231, %s232
      %p243 = scmp.eq.s32.totalorder %s29, 0
      %p244 = por %p242, %p243
      %p245 = scmp.ne.s32.totalorder %s231, %s232
      %p246 = scmp.eq.s32.totalorder %s30, 1
      %p247 = por %p245, %p246
      %p249 = scmp.ne.s32.totalorder %s232, %s248
      %p250 = scmp.eq.s32.totalorder %s30, 0
      %p251 = por %p249, %p250
      %p252 = scmp.le.s32.totalorder 1, %s24
      %p253 = scmp.lt.s32.totalorder %s24, 3
      %p254 = pnand %p252, %p253
      %p255 = pneg %p254
      // Predicated region
      $region9: #{tpu_custom_call.1} parent=5 // pred_check
        _
      $region10: #{tpu_custom_call.1} parent=5 // pred_check_branch
        %257 = sbr.rel (%p254) target = $region12
      $region11: #{tpu_custom_call.1} parent=5 // pred_region
        %s258 = ssub.s32 %s24, 1
        // Predicated region
        $region13: #{tpu_custom_call.1} parent=11 // pred_check
          %p259 = pneg %p71
        $region14: #{tpu_custom_call.1} parent=11 // pred_check_branch
          %261 = sbr.rel (%p259) target = $region16
        $region15: #{tpu_custom_call.1} parent=11 // pred_region
          %s263 = ssub.s32 256, 256
          %264 = vsyncadd [#allocation6], %s263
          %s265 = sshll.u32 [#allocation5], 4
          %s266 = int_to_ptr.vmem [resolvable:$true] %s265
          %271 = dma.hbm_to_vmem [thread:$0]  %s1, 256, %s266, [#allocation6], 128, 128, 8
        $region16: #{tpu_custom_call.1} parent=11 // pred_fallthru
          _
        // Predicated region
        $region17: #{tpu_custom_call.1} parent=11 // pred_check
          %p272 = pneg %p92
        $region18: #{tpu_custom_call.1} parent=11 // pred_check_branch
          %274 = sbr.rel (%p272) target = $region20
        $region19: #{tpu_custom_call.1} parent=11 // pred_region
          %s276 = ssub.s32 512, 512
          %277 = vsyncadd [#allocation6], %s276
          %s278 = sshll.u32 [#allocation7], 4
          %s279 = int_to_ptr.vmem [resolvable:$true] %s278
          %284 = dma.hbm_to_vmem [thread:$0]  %s2, 512, %s279, [#allocation6], 128, 128, 8
        $region20: #{tpu_custom_call.1} parent=11 // pred_fallthru
          _
        // Predicated region
        $region21: #{tpu_custom_call.1} parent=11 // pred_check
          %p285 = pneg %p113
        $region22: #{tpu_custom_call.1} parent=11 // pred_check_branch
          %287 = sbr.rel (%p285) target = $region24
        $region23: #{tpu_custom_call.1} parent=11 // pred_region
          %s289 = ssub.s32 512, 512
          %290 = vsyncadd [#allocation9], %s289
          %s291 = sshll.u32 [#allocation8], 4
          %s292 = int_to_ptr.vmem [resolvable:$true] %s291
          %297 = dma.hbm_to_vmem [thread:$0]  %s3, 512, %s292, [#allocation9], 128, 128, 8
        $region24: #{tpu_custom_call.1} parent=11 // pred_fallthru
          _
        // Predicated region
        $region25: #{tpu_custom_call.1} parent=11 // pred_check
          %p298 = pneg %p134
        $region26: #{tpu_custom_call.1} parent=11 // pred_check_branch
          %300 = sbr.rel (%p298) target = $region28
        $region27: #{tpu_custom_call.1} parent=11 // pred_region
          %s302 = ssub.s32 512, 512
          %303 = vsyncadd [#allocation9], %s302
          %s304 = sshll.u32 [#allocation10], 4
          %s305 = int_to_ptr.vmem [resolvable:$true] %s304
          %310 = dma.hbm_to_vmem [thread:$0]  %s4, 512, %s305, [#allocation9], 128, 128, 8
        $region28: #{tpu_custom_call.1} parent=11 // pred_fallthru
          _
        // Predicated region
        $region29: #{tpu_custom_call.1} parent=11 // pred_check
          %p311 = pneg %p155
        $region30: #{tpu_custom_call.1} parent=11 // pred_check_branch
          %313 = sbr.rel (%p311) target = $region32
        $region31: #{tpu_custom_call.1} parent=11 // pred_region
          %s315 = ssub.s32 512, 512
          %316 = vsyncadd [#allocation12], %s315
          %s317 = sshll.u32 [#allocation11], 4
          %s318 = int_to_ptr.vmem [resolvable:$true] %s317
          %323 = dma.hbm_to_vmem [thread:$0]  %s5, 512, %s318, [#allocation12], 128, 128, 8
        $region32: #{tpu_custom_call.1} parent=11 // pred_fallthru
          _
        // Predicated region
        $region33: #{tpu_custom_call.1} parent=11 // pred_check
          %p324 = pneg %p176
        $region34: #{tpu_custom_call.1} parent=11 // pred_check_branch
          %326 = sbr.rel (%p324) target = $region36
        $region35: #{tpu_custom_call.1} parent=11 // pred_region
          %s328 = ssub.s32 512, 512
          %329 = vsyncadd [#allocation12], %s328
          %s330 = sshll.u32 [#allocation13], 4
          %s331 = int_to_ptr.vmem [resolvable:$true] %s330
          %336 = dma.hbm_to_vmem [thread:$0]  %s6, 512, %s331, [#allocation12], 128, 128, 8
        $region36: #{tpu_custom_call.1} parent=11 // pred_fallthru
          _
        // Predicated region
        $region37: #{tpu_custom_call.1} parent=11 // pred_check
          %p337 = pneg %p197
        $region38: #{tpu_custom_call.1} parent=11 // pred_check_branch
          %339 = sbr.rel (%p337) target = $region40
        $region39: #{tpu_custom_call.1} parent=11 // pred_region
          _
        $region40: #{tpu_custom_call.1} parent=11 // pred_fallthru
          _
        // Predicated region
        $region41: #{tpu_custom_call.1} parent=11 // pred_check
          %p340 = pneg %p218
        $region42: #{tpu_custom_call.1} parent=11 // pred_check_branch
          %342 = sbr.rel (%p340) target = $region44
        $region43: #{tpu_custom_call.1} parent=11 // pred_region
          _
        $region44: #{tpu_custom_call.1} parent=11 // pred_fallthru
          _
      $region12: #{tpu_custom_call.1} parent=5 // pred_fallthru
        _
      %p343 = scmp.lt.s32.totalorder %s24, 2
      // Predicated region
      $region45: #{tpu_custom_call.1} parent=5 // pred_check
        %p344 = pneg %p343
      $region46: #{tpu_custom_call.1} parent=5 // pred_check_branch
        %346 = sbr.rel (%p344) target = $region48
      $region47: #{tpu_custom_call.1} parent=5 // pred_region
        // Predicated region
        $region49: #{tpu_custom_call.1} parent=47 // pred_check
          %p347 = pneg %p44
        $region50: #{tpu_custom_call.1} parent=47 // pred_check_branch
          %349 = sbr.rel (%p347) target = $region52
        $region51: #{tpu_custom_call.1} parent=47 // pred_region
          %s350 = sand.u32 %s34, 1
          %s351 = scalar_lea.sflag [#allocation3], %s350
          %s352 = sand.u32 %s34, 1
          %s353 = smul.addr %s352, 16
          %s354 = scalar_lea.vmem [#allocation2], %s353
          %s356 = ssub.s32 256, 256
          %357 = vsyncadd %s351, %s356
          %s358 = smul.addr %s24, 2
          %s359 = smul.addr %s358, 128
          %s360 = scalar_lea.hbm %s0, %s359
          %s361 = sshll.u32 %s354, 4
          %s362 = int_to_ptr.vmem [resolvable:$true] %s361
          %367 = dma.hbm_to_vmem [thread:$0]  %s360, 256, %s362, %s351, 128, 128, 8
        $region52: #{tpu_custom_call.1} parent=47 // pred_fallthru
          _
      $region48: #{tpu_custom_call.1} parent=5 // pred_fallthru
        _
      %p368 = scmp.le.s32.totalorder 1, %s24
      %p369 = scmp.lt.s32.totalorder %s24, 3
      %p370 = pnand %p368, %p369
      %p371 = pneg %p370
      // Predicated region
      $region53: #{tpu_custom_call.1} parent=5 // pred_check
        _
      $region54: #{tpu_custom_call.1} parent=5 // pred_check_branch
        %373 = sbr.rel (%p370) target = $region56
      $region55: #{tpu_custom_call.1} parent=5 // pred_region
        %s374 = ssub.s32 %s24, 1
        %s375 = sand.u32 %s37, 1
        %s376 = scalar_lea.sflag [#allocation3], %s375
        %s377 = sand.u32 %s37, 1
        %s378 = smul.addr %s377, 16
        %s379 = scalar_lea.vmem [#allocation2], %s378
        // Predicated region
        $region57: #{tpu_custom_call.1} parent=55 // pred_check
          %p380 = pneg %p50
        $region58: #{tpu_custom_call.1} parent=55 // pred_check_branch
          %382 = sbr.rel (%p380) target = $region60
        $region59: #{tpu_custom_call.1} parent=55 // pred_region
          %383 = dma.done %s376, 256
        $region60: #{tpu_custom_call.1} parent=55 // pred_fallthru
          _
        // Predicated region
        $region61: #{tpu_custom_call.1} parent=55 // pred_check
          %p384 = pneg %p71
        $region62: #{tpu_custom_call.1} parent=55 // pred_check_branch
          %386 = sbr.rel (%p384) target = $region64
        $region63: #{tpu_custom_call.1} parent=55 // pred_region
          %387 = dma.done [#allocation6], 256
        $region64: #{tpu_custom_call.1} parent=55 // pred_fallthru
          _
        // Predicated region
        $region65: #{tpu_custom_call.1} parent=55 // pred_check
          %p388 = pneg %p92
        $region66: #{tpu_custom_call.1} parent=55 // pred_check_branch
          %390 = sbr.rel (%p388) target = $region68
        $region67: #{tpu_custom_call.1} parent=55 // pred_region
          %391 = dma.done [#allocation6], 512
        $region68: #{tpu_custom_call.1} parent=55 // pred_fallthru
          _
        // Predicated region
        $region69: #{tpu_custom_call.1} parent=55 // pred_check
          %p392 = pneg %p113
        $region70: #{tpu_custom_call.1} parent=55 // pred_check_branch
          %394 = sbr.rel (%p392) target = $region72
        $region71: #{tpu_custom_call.1} parent=55 // pred_region
          %395 = dma.done [#allocation9], 512
        $region72: #{tpu_custom_call.1} parent=55 // pred_fallthru
          _
        // Predicated region
        $region73: #{tpu_custom_call.1} parent=55 // pred_check
          %p396 = pneg %p134
        $region74: #{tpu_custom_call.1} parent=55 // pred_check_branch
          %398 = sbr.rel (%p396) target = $region76
        $region75: #{tpu_custom_call.1} parent=55 // pred_region
          %399 = dma.done [#allocation9], 512
        $region76: #{tpu_custom_call.1} parent=55 // pred_fallthru
          _
        // Predicated region
        $region77: #{tpu_custom_call.1} parent=55 // pred_check
          %p400 = pneg %p155
        $region78: #{tpu_custom_call.1} parent=55 // pred_check_branch
          %402 = sbr.rel (%p400) target = $region80
        $region79: #{tpu_custom_call.1} parent=55 // pred_region
          %403 = dma.done [#allocation12], 512
        $region80: #{tpu_custom_call.1} parent=55 // pred_fallthru
          _
        // Predicated region
        $region81: #{tpu_custom_call.1} parent=55 // pred_check
          %p404 = pneg %p176
        $region82: #{tpu_custom_call.1} parent=55 // pred_check_branch
          %406 = sbr.rel (%p404) target = $region84
        $region83: #{tpu_custom_call.1} parent=55 // pred_region
          %407 = dma.done [#allocation12], 512
        $region84: #{tpu_custom_call.1} parent=55 // pred_fallthru
          _
        %s408 = sand.u32 %s37, 1
        %s409 = scalar_lea.sflag [#allocation3], %s408
        %s410 = sand.u32 %s37, 1
        %s411 = smul.addr %s410, 16
        %s412 = scalar_lea.vmem [#allocation2], %s411
        %p413 = pneg %p50
        %p414 = pneg %p47
        %p415 = pneg %p71
        %p416 = pneg %p68
        %p417 = pneg %p92
        %p418 = pneg %p89
        %p419 = pneg %p113
        %p420 = pneg %p110
        %p421 = pneg %p134
        %p422 = pneg %p131
        %p423 = pneg %p155
        %p424 = pneg %p152
        %p425 = pneg %p176
        %p426 = pneg %p173
        %p427 = pneg %p197
        %p428 = pneg %p194
        %p429 = pneg %p218
        %p430 = pneg %p215
        %p431 = pneg %p244
        %p432 = pneg %p241
        %s433 = sand.u32 %s231, 1
        %s434 = scalar_lea.sflag [#allocation4], %s433
        %s435 = sand.u32 %s231, 1
        %s436 = smul.addr %s435, 16
        %s437 = scalar_lea.vmem [#allocation14], %s436
        %v438 = vld [vmem:[%s379] sm:$0xff]
        %v439 = vld [vmem:[%s379 + $0x8] sm:$0xff]
        %v440 = vld [vmem:[#allocation5] sm:$0xff]
        %v441 = vld [vmem:[#allocation5 + $0x8] sm:$0xff]
        %v442 = vadd.f32 %v438, %v440
        %v443 = vadd.f32 %v439, %v441
        %v444 = vld [vmem:[#allocation7] sm:$0xff]
        %v445 = vld [vmem:[#allocation7 + $0x8] sm:$0xff]
        %v446 = vld [vmem:[#allocation7 + $0x10] sm:$0xff]
        %v447 = vld [vmem:[#allocation7 + $0x18] sm:$0xff]
        %vm448 = vcmask 261120
        %v450 = vsel %vm448, %v442, 0
        %v453 = vsel %vm448, %v443, 0
        %455 = vmatprep.subr.mxu0 0.0
        %456 = vmatpush1.msra.mxu0 %v444
        %457 = vmatprep.subr.mxu0 0.0
        %458 = vmatpush1.msra.mxu0 %v445
        %459 = vmatprep.subr.mxu0 0.0
        %460 = vmatpush1.msra.mxu0 %v446
        %461 = vmatprep.subr.mxu0 0.0
        %462 = vmatpush1.msra.mxu0 %v447
        %463 = vmatprep.subr.mxu0 0.0
        %464 = vmatpush1.msra.mxu0 0.0
        %465 = vmatprep.subr.mxu0 0.0
        %466 = vmatpush1.msra.mxu0 0.0
        %467 = vmatprep.subr.mxu0 0.0
        %468 = vmatpush1.msra.mxu0 0.0
        %469 = vmatprep.subr.mxu0 0.0
        %470 = vmatpush1.msra.mxu0 0.0
        %471 = vmatprep.subr.mxu0 0.0
        %472 = vmatpush1.msra.mxu0 0.0
        %473 = vmatprep.subr.mxu0 0.0
        %474 = vmatpush1.msra.mxu0 0.0
        %475 = vmatprep.subr.mxu0 0.0
        %476 = vmatpush1.msra.mxu0 0.0
        %477 = vmatprep.subr.mxu0 0.0
        %478 = vmatpush1.msra.mxu0 0.0
        %479 = vmatprep.subr.mxu0 0.0
        %480 = vmatpush1.msra.mxu0 0.0
        %481 = vmatprep.subr.mxu0 0.0
        %482 = vmatpush1.msra.mxu0 0.0
        %483 = vmatprep.subr.mxu0 0.0
        %484 = vmatpush1.msra.mxu0 0.0
        %485 = vmatprep.subr.mxu0 0.0
        %486 = vmatpush1.msra.mxu0 0.0
        %487 = vmatprep.subr.mxu0 0.0
        %488 = vmatpush1.msra.mxu0 0.0
        %489 = vmatprep.subr.mxu0 0.0
        %490 = vmatpush1.msra.mxu0 0.0
        %491 = vmatprep.subr.mxu0 0.0
        %492 = vmatpush1.msra.mxu0 0.0
        %493 = vmatprep.subr.mxu0 0.0
        %494 = vmatpush1.msra.mxu0 0.0
        %495 = vmatprep.subr.mxu0 0.0
        %496 = vmatpush1.msra.mxu0 0.0
        %497 = vmatprep.subr.mxu0 0.0
        %498 = vmatpush1.msra.mxu0 0.0
        %499 = vmatprep.subr.mxu0 0.0
        %500 = vmatpush1.msra.mxu0 0.0
        %501 = vmatprep.subr.mxu0 0.0
        %502 = vmatpush1.msra.mxu0 0.0
        %503 = vmatprep.subr.mxu0 0.0
        %504 = vmatpush1.msra.mxu0 0.0
        %505 = vmatprep.subr.mxu0 0.0
        %506 = vmatpush1.msra.mxu0 0.0
        %507 = vmatprep.subr.mxu0 0.0
        %508 = vmatpush1.msra.mxu0 0.0
        %509 = vmatprep.subr.mxu0 0.0
        %510 = vmatpush1.msra.mxu0 0.0
        %511 = vmatprep.subr.mxu0 0.0
        %512 = vmatpush1.msra.mxu0 0.0
        %513 = vmatprep.subr.mxu0 0.0
        %514 = vmatpush1.msra.mxu0 0.0
        %515 = vmatprep.subr.mxu0 0.0
        %516 = vmatpush1.msra.mxu0 0.0
        %517 = vmatprep.subr.mxu0 0.0
        %518 = vmatpush1.msra.mxu0 0.0
        %519 = vmatprep.mubr.f32.mxu0 0.0
        %520 = vmatmul.mubr.f32.gmra.mrb[0].mxu0 %v450
        %v521 = vpop.f32.mrb[0].mxu0
        %v522 = vadd.f32 0.0, %v521
        %v523 = vpop.f32.mrb[0].mxu0
        %524 = vmatprep.mubr.f32.mxu0 0.0
        %525 = vmatmul.mubr.f32.gmra.mrb[0].mxu0 %v453
        %v526 = vpop.f32.mrb[0].mxu0
        %v527 = vadd.f32 0.0, %v526
        %v528 = vpop.f32.mrb[0].mxu0
        %529 = vdwg.mxu0
        %v530 = vld [vmem:[#allocation8] sm:$0xff]
        %v531 = vld [vmem:[#allocation8 + $0x8] sm:$0xff]
        %v532 = vld [vmem:[#allocation8 + $0x10] sm:$0xff]
        %v533 = vld [vmem:[#allocation8 + $0x18] sm:$0xff]
        %534 = vmatprep.subr.mxu0 0.0
        %535 = vmatpush1.msra.mxu0 %v530
        %536 = vmatprep.subr.mxu0 0.0
        %537 = vmatpush1.msra.mxu0 %v531
        %538 = vmatprep.subr.mxu0 0.0
        %539 = vmatpush1.msra.mxu0 %v532
        %540 = vmatprep.subr.mxu0 0.0
        %541 = vmatpush1.msra.mxu0 %v533
        %542 = vmatprep.subr.mxu0 0.0
        %543 = vmatpush1.msra.mxu0 0.0
        %544 = vmatprep.subr.mxu0 0.0
        %545 = vmatpush1.msra.mxu0 0.0
        %546 = vmatprep.subr.mxu0 0.0
        %547 = vmatpush1.msra.mxu0 0.0
        %548 = vmatprep.subr.mxu0 0.0
        %549 = vmatpush1.msra.mxu0 0.0
        %550 = vmatprep.subr.mxu0 0.0
        %551 = vmatpush1.msra.mxu0 0.0
        %552 = vmatprep.subr.mxu0 0.0
        %553 = vmatpush1.msra.mxu0 0.0
        %554 = vmatprep.subr.mxu0 0.0
        %555 = vmatpush1.msra.mxu0 0.0
        %556 = vmatprep.subr.mxu0 0.0
        %557 = vmatpush1.msra.mxu0 0.0
        %558 = vmatprep.subr.mxu0 0.0
        %559 = vmatpush1.msra.mxu0 0.0
        %560 = vmatprep.subr.mxu0 0.0
        %561 = vmatpush1.msra.mxu0 0.0
        %562 = vmatprep.subr.mxu0 0.0
        %563 = vmatpush1.msra.mxu0 0.0
        %564 = vmatprep.subr.mxu0 0.0
        %565 = vmatpush1.msra.mxu0 0.0
        %566 = vmatprep.subr.mxu0 0.0
        %567 = vmatpush1.msra.mxu0 0.0
        %568 = vmatprep.subr.mxu0 0.0
        %569 = vmatpush1.msra.mxu0 0.0
        %570 = vmatprep.subr.mxu0 0.0
        %571 = vmatpush1.msra.mxu0 0.0
        %572 = vmatprep.subr.mxu0 0.0
        %573 = vmatpush1.msra.mxu0 0.0
        %574 = vmatprep.subr.mxu0 0.0
        %575 = vmatpush1.msra.mxu0 0.0
        %576 = vmatprep.subr.mxu0 0.0
        %577 = vmatpush1.msra.mxu0 0.0
        %578 = vmatprep.subr.mxu0 0.0
        %579 = vmatpush1.msra.mxu0 0.0
        %580 = vmatprep.subr.mxu0 0.0
        %581 = vmatpush1.msra.mxu0 0.0
        %582 = vmatprep.subr.mxu0 0.0
        %583 = vmatpush1.msra.mxu0 0.0
        %584 = vmatprep.subr.mxu0 0.0
        %585 = vmatpush1.msra.mxu0 0.0
        %586 = vmatprep.subr.mxu0 0.0
        %587 = vmatpush1.msra.mxu0 0.0
        %588 = vmatprep.subr.mxu0 0.0
        %589 = vmatpush1.msra.mxu0 0.0
        %590 = vmatprep.subr.mxu0 0.0
        %591 = vmatpush1.msra.mxu0 0.0
        %592 = vmatprep.subr.mxu0 0.0
        %593 = vmatpush1.msra.mxu0 0.0
        %594 = vmatprep.subr.mxu0 0.0
        %595 = vmatpush1.msra.mxu0 0.0
        %596 = vmatprep.subr.mxu0 0.0
        %597 = vmatpush1.msra.mxu0 0.0
        %598 = vmatprep.mubr.f32.mxu0 0.0
        %599 = vmatmul.mubr.f32.gmra.mrb[0].mxu0 %v450
        %v600 = vpop.f32.mrb[0].mxu0
        %v601 = vadd.f32 0.0, %v600
        %v602 = vpop.f32.mrb[0].mxu0
        %603 = vmatprep.mubr.f32.mxu0 0.0
        %604 = vmatmul.mubr.f32.gmra.mrb[0].mxu0 %v453
        %v605 = vpop.f32.mrb[0].mxu0
        %v606 = vadd.f32 0.0, %v605
        %v607 = vpop.f32.mrb[0].mxu0
        %608 = vdwg.mxu0
        %v609 = vld [vmem:[#allocation10] sm:$0xff]
        %v610 = vld [vmem:[#allocation10 + $0x8] sm:$0xff]
        %v611 = vld [vmem:[#allocation10 + $0x10] sm:$0xff]
        %v612 = vld [vmem:[#allocation10 + $0x18] sm:$0xff]
        %613 = vmatprep.subr.mxu0 0.0
        %614 = vmatpush1.msra.mxu0 %v609
        %615 = vmatprep.subr.mxu0 0.0
        %616 = vmatpush1.msra.mxu0 %v610
        %617 = vmatprep.subr.mxu0 0.0
        %618 = vmatpush1.msra.mxu0 %v611
        %619 = vmatprep.subr.mxu0 0.0
        %620 = vmatpush1.msra.mxu0 %v612
        %621 = vmatprep.subr.mxu0 0.0
        %622 = vmatpush1.msra.mxu0 0.0
        %623 = vmatprep.subr.mxu0 0.0
        %624 = vmatpush1.msra.mxu0 0.0
        %625 = vmatprep.subr.mxu0 0.0
        %626 = vmatpush1.msra.mxu0 0.0
        %627 = vmatprep.subr.mxu0 0.0
        %628 = vmatpush1.msra.mxu0 0.0
        %629 = vmatprep.subr.mxu0 0.0
        %630 = vmatpush1.msra.mxu0 0.0
        %631 = vmatprep.subr.mxu0 0.0
        %632 = vmatpush1.msra.mxu0 0.0
        %633 = vmatprep.subr.mxu0 0.0
        %634 = vmatpush1.msra.mxu0 0.0
        %635 = vmatprep.subr.mxu0 0.0
        %636 = vmatpush1.msra.mxu0 0.0
        %637 = vmatprep.subr.mxu0 0.0
        %638 = vmatpush1.msra.mxu0 0.0
        %639 = vmatprep.subr.mxu0 0.0
        %640 = vmatpush1.msra.mxu0 0.0
        %641 = vmatprep.subr.mxu0 0.0
        %642 = vmatpush1.msra.mxu0 0.0
        %643 = vmatprep.subr.mxu0 0.0
        %644 = vmatpush1.msra.mxu0 0.0
        %645 = vmatprep.subr.mxu0 0.0
        %646 = vmatpush1.msra.mxu0 0.0
        %647 = vmatprep.subr.mxu0 0.0
        %648 = vmatpush1.msra.mxu0 0.0
        %649 = vmatprep.subr.mxu0 0.0
        %650 = vmatpush1.msra.mxu0 0.0
        %651 = vmatprep.subr.mxu0 0.0
        %652 = vmatpush1.msra.mxu0 0.0
        %653 = vmatprep.subr.mxu0 0.0
        %654 = vmatpush1.msra.mxu0 0.0
        %655 = vmatprep.subr.mxu0 0.0
        %656 = vmatpush1.msra.mxu0 0.0
        %657 = vmatprep.subr.mxu0 0.0
        %658 = vmatpush1.msra.mxu0 0.0
        %659 = vmatprep.subr.mxu0 0.0
        %660 = vmatpush1.msra.mxu0 0.0
        %661 = vmatprep.subr.mxu0 0.0
        %662 = vmatpush1.msra.mxu0 0.0
        %663 = vmatprep.subr.mxu0 0.0
        %664 = vmatpush1.msra.mxu0 0.0
        %665 = vmatprep.subr.mxu0 0.0
        %666 = vmatpush1.msra.mxu0 0.0
        %667 = vmatprep.subr.mxu0 0.0
        %668 = vmatpush1.msra.mxu0 0.0
        %669 = vmatprep.subr.mxu0 0.0
        %670 = vmatpush1.msra.mxu0 0.0
        %671 = vmatprep.subr.mxu0 0.0
        %672 = vmatpush1.msra.mxu0 0.0
        %673 = vmatprep.subr.mxu0 0.0
        %674 = vmatpush1.msra.mxu0 0.0
        %675 = vmatprep.subr.mxu0 0.0
        %676 = vmatpush1.msra.mxu0 0.0
        %677 = vmatprep.mubr.f32.mxu0 0.0
        %678 = vmatmul.mubr.f32.gmra.mrb[0].mxu0 %v450
        %v679 = vpop.f32.mrb[0].mxu0
        %v680 = vadd.f32 0.0, %v679
        %v681 = vpop.f32.mrb[0].mxu0
        %682 = vmatprep.mubr.f32.mxu0 0.0
        %683 = vmatmul.mubr.f32.gmra.mrb[0].mxu0 %v453
        %v684 = vpop.f32.mrb[0].mxu0
        %v685 = vadd.f32 0.0, %v684
        %v686 = vpop.f32.mrb[0].mxu0
        %687 = vdwg.mxu0
        %v688 = vmul.f32 %v680, 0.35355338
        %v689 = vmul.f32 %v685, 0.35355338
        %vm690 = vcmask 64512
        %v692 = vsel %vm690, %v688, 0
        %v695 = vsel %vm690, %v689, 0
        %v698 = vsel %vm690, %v522, 0
        %v701 = vsel %vm690, %v527, 0
        %703 = vmatprep.subr.mxu0 0.0
        %704 = vmatpush1.xpose.msra.mxu0 %v698
        %705 = vmatprep.subr.mxu0 0.0
        %706 = vmatpush1.xpose.msra.mxu0 %v701
        %707 = vmatprep.subr.mxu0 0.0
        %708 = vmatpush1.xpose.msra.mxu0 0.0
        %709 = vmatprep.subr.mxu0 0.0
        %710 = vmatpush1.xpose.msra.mxu0 0.0
        %711 = vmatprep.subr.mxu0 0.0
        %712 = vmatpush1.xpose.msra.mxu0 0.0
        %713 = vmatprep.subr.mxu0 0.0
        %714 = vmatpush1.xpose.msra.mxu0 0.0
        %715 = vmatprep.subr.mxu0 0.0
        %716 = vmatpush1.xpose.msra.mxu0 0.0
        %717 = vmatprep.subr.mxu0 0.0
        %718 = vmatpush1.xpose.msra.mxu0 0.0
        %719 = vmatprep.subr.mxu0 0.0
        %720 = vmatpush1.xpose.msra.mxu0 0.0
        %721 = vmatprep.subr.mxu0 0.0
        %722 = vmatpush1.xpose.msra.mxu0 0.0
        %723 = vmatprep.subr.mxu0 0.0
        %724 = vmatpush1.xpose.msra.mxu0 0.0
        %725 = vmatprep.subr.mxu0 0.0
        %726 = vmatpush1.xpose.msra.mxu0 0.0
        %727 = vmatprep.subr.mxu0 0.0
        %728 = vmatpush1.xpose.msra.mxu0 0.0
        %729 = vmatprep.subr.mxu0 0.0
        %730 = vmatpush1.xpose.msra.mxu0 0.0
        %731 = vmatprep.subr.mxu0 0.0
        %732 = vmatpush1.xpose.msra.mxu0 0.0
        %733 = vmatprep.subr.mxu0 0.0
        %734 = vmatpush1.xpose.msra.mxu0 0.0
        %735 = vmatprep.subr.mxu0 0.0
        %736 = vmatpush1.xpose.msra.mxu0 0.0
        %737 = vmatprep.subr.mxu0 0.0
        %738 = vmatpush1.xpose.msra.mxu0 0.0
        %739 = vmatprep.subr.mxu0 0.0
        %740 = vmatpush1.xpose.msra.mxu0 0.0
        %741 = vmatprep.subr.mxu0 0.0
        %742 = vmatpush1.xpose.msra.mxu0 0.0
        %743 = vmatprep.subr.mxu0 0.0
        %744 = vmatpush1.xpose.msra.mxu0 0.0
        %745 = vmatprep.subr.mxu0 0.0
        %746 = vmatpush1.xpose.msra.mxu0 0.0
        %747 = vmatprep.subr.mxu0 0.0
        %748 = vmatpush1.xpose.msra.mxu0 0.0
        %749 = vmatprep.subr.mxu0 0.0
        %750 = vmatpush1.xpose.msra.mxu0 0.0
        %751 = vmatprep.subr.mxu0 0.0
        %752 = vmatpush1.xpose.msra.mxu0 0.0
        %753 = vmatprep.subr.mxu0 0.0
        %754 = vmatpush1.xpose.msra.mxu0 0.0
        %755 = vmatprep.subr.mxu0 0.0
        %756 = vmatpush1.xpose.msra.mxu0 0.0
        %757 = vmatprep.subr.mxu0 0.0
        %758 = vmatpush1.xpose.msra.mxu0 0.0
        %759 = vmatprep.subr.mxu0 0.0
        %760 = vmatpush1.xpose.msra.mxu0 0.0
        %761 = vmatprep.subr.mxu0 0.0
        %762 = vmatpush1.xpose.msra.mxu0 0.0
        %763 = vmatprep.subr.mxu0 0.0
        %764 = vmatpush1.xpose.msra.mxu0 0.0
        %765 = vmatprep.subr.mxu0 0.0
        %766 = vmatpush1.xpose.msra.mxu0 0.0
        %767 = vmatprep.mubr.f32.mxu0 0.0
        %768 = vmatmul.mubr.f32.gmra.mrb[0].mxu0 %v692
        %v769 = vpop.f32.mrb[0].mxu0
        %v770 = vadd.f32 0.0, %v769
        %v771 = vpop.f32.mrb[0].mxu0
        %772 = vmatprep.mubr.f32.mxu0 0.0
        %773 = vmatmul.mubr.f32.gmra.mrb[0].mxu0 %v695
        %v774 = vpop.f32.mrb[0].mxu0
        %v775 = vadd.f32 0.0, %v774
        %v776 = vpop.f32.mrb[0].mxu0
        %777 = vdwg.mxu0
        %vm778 = vcmask 130048
        %v779 = vsel %vm778, %v770, -inf
        %780 = vmax.xlane.f32.xlu0 %v779
        %v781 = vpop.xlane.xlu0 %780
        %v782 = vsel %vm778, %v775, -inf
        %783 = vmax.xlane.f32.xlu0 %v782
        %v784 = vpop.xlane.xlu0 %783
        %v785 = vsub.f32 %v770, %v781
        %v786 = vsub.f32 %v775, %v784
        %v787 = vmul.f32 %v785, 1.442695
        %v788 = vpow.pop %v787
        %v789 = vmul.f32 %v786, 1.442695
        %v790 = vpow.pop %v789
        %v791 = vsel %vm778, %v788, 0.0
        %792 = vadd.xlane.f32.xlu0 %v791
        %v793 = vpop.xlane.xlu0 %792
        %v794 = vsel %vm778, %v790, 0.0
        %795 = vadd.xlane.f32.xlu0 %v794
        %v796 = vpop.xlane.xlu0 %795
        %v797 = vrcp.pop %v793
        %v798 = vmul.f32 %v788, %v797
        %v799 = vrcp.pop %v796
        %v800 = vmul.f32 %v790, %v799
        %v802 = vsel %vm778, %v798, 0
        %v805 = vsel %vm778, %v800, 0
        %807 = vmatprep.subr.mxu0 0.0
        %808 = vmatpush1.msra.mxu0 %v601
        %809 = vmatprep.subr.mxu0 0.0
        %810 = vmatpush1.msra.mxu0 %v606
        %811 = vmatprep.subr.mxu0 0.0
        %812 = vmatpush1.msra.mxu0 0.0
        %813 = vmatprep.subr.mxu0 0.0
        %814 = vmatpush1.msra.mxu0 0.0
        %815 = vmatprep.subr.mxu0 0.0
        %816 = vmatpush1.msra.mxu0 0.0
        %817 = vmatprep.subr.mxu0 0.0
        %818 = vmatpush1.msra.mxu0 0.0
        %819 = vmatprep.subr.mxu0 0.0
        %820 = vmatpush1.msra.mxu0 0.0
        %821 = vmatprep.subr.mxu0 0.0
        %822 = vmatpush1.msra.mxu0 0.0
        %823 = vmatprep.subr.mxu0 0.0
        %824 = vmatpush1.msra.mxu0 0.0
        %825 = vmatprep.subr.mxu0 0.0
        %826 = vmatpush1.msra.mxu0 0.0
        %827 = vmatprep.subr.mxu0 0.0
        %828 = vmatpush1.msra.mxu0 0.0
        %829 = vmatprep.subr.mxu0 0.0
        %830 = vmatpush1.msra.mxu0 0.0
        %831 = vmatprep.subr.mxu0 0.0
        %832 = vmatpush1.msra.mxu0 0.0
        %833 = vmatprep.subr.mxu0 0.0
        %834 = vmatpush1.msra.mxu0 0.0
        %835 = vmatprep.subr.mxu0 0.0
        %836 = vmatpush1.msra.mxu0 0.0
        %837 = vmatprep.subr.mxu0 0.0
        %838 = vmatpush1.msra.mxu0 0.0
        %839 = vmatprep.subr.mxu0 0.0
        %840 = vmatpush1.msra.mxu0 0.0
        %841 = vmatprep.subr.mxu0 0.0
        %842 = vmatpush1.msra.mxu0 0.0
        %843 = vmatprep.subr.mxu0 0.0
        %844 = vmatpush1.msra.mxu0 0.0
        %845 = vmatprep.subr.mxu0 0.0
        %846 = vmatpush1.msra.mxu0 0.0
        %847 = vmatprep.subr.mxu0 0.0
        %848 = vmatpush1.msra.mxu0 0.0
        %849 = vmatprep.subr.mxu0 0.0
        %850 = vmatpush1.msra.mxu0 0.0
        %851 = vmatprep.subr.mxu0 0.0
        %852 = vmatpush1.msra.mxu0 0.0
        %853 = vmatprep.subr.mxu0 0.0
        %854 = vmatpush1.msra.mxu0 0.0
        %855 = vmatprep.subr.mxu0 0.0
        %856 = vmatpush1.msra.mxu0 0.0
        %857 = vmatprep.subr.mxu0 0.0
        %858 = vmatpush1.msra.mxu0 0.0
        %859 = vmatprep.subr.mxu0 0.0
        %860 = vmatpush1.msra.mxu0 0.0
        %861 = vmatprep.subr.mxu0 0.0
        %862 = vmatpush1.msra.mxu0 0.0
        %863 = vmatprep.subr.mxu0 0.0
        %864 = vmatpush1.msra.mxu0 0.0
        %865 = vmatprep.subr.mxu0 0.0
        %866 = vmatpush1.msra.mxu0 0.0
        %867 = vmatprep.subr.mxu0 0.0
        %868 = vmatpush1.msra.mxu0 0.0
        %869 = vmatprep.subr.mxu0 0.0
        %870 = vmatpush1.msra.mxu0 0.0
        %871 = vmatprep.mubr.f32.mxu0 0.0
        %872 = vmatmul.mubr.f32.gmra.mrb[0].mxu0 %v802
        %v873 = vpop.f32.mrb[0].mxu0
        %v874 = vadd.f32 0.0, %v873
        %v875 = vpop.f32.mrb[0].mxu0
        %876 = vmatprep.mubr.f32.mxu0 0.0
        %877 = vmatmul.mubr.f32.gmra.mrb[0].mxu0 %v805
        %v878 = vpop.f32.mrb[0].mxu0
        %v879 = vadd.f32 0.0, %v878
        %v880 = vpop.f32.mrb[0].mxu0
        %881 = vdwg.mxu0
        %882 = vrot.lane.b32.xlu0 %v688, 120
        %v883 = vpop.permute.xlu0 %882
        %884 = vrot.lane.b32.xlu0 %v689, 120
        %v885 = vpop.permute.xlu0 %884
        %886 = vrot.lane.b32.xlu0 %v522, 120
        %v887 = vpop.permute.xlu0 %886
        %888 = vrot.lane.b32.xlu0 %v527, 120
        %v889 = vpop.permute.xlu0 %888
        %v890 = vsel %vm690, %v883, 0
        %v892 = vsel %vm690, %v885, 0
        %v894 = vsel %vm690, %v887, 0
        %v896 = vsel %vm690, %v889, 0
        %898 = vmatprep.subr.mxu0 0.0
        %899 = vmatpush1.xpose.msra.mxu0 %v894
        %900 = vmatprep.subr.mxu0 0.0
        %901 = vmatpush1.xpose.msra.mxu0 %v896
        %902 = vmatprep.subr.mxu0 0.0
        %903 = vmatpush1.xpose.msra.mxu0 0.0
        %904 = vmatprep.subr.mxu0 0.0
        %905 = vmatpush1.xpose.msra.mxu0 0.0
        %906 = vmatprep.subr.mxu0 0.0
        %907 = vmatpush1.xpose.msra.mxu0 0.0
        %908 = vmatprep.subr.mxu0 0.0
        %909 = vmatpush1.xpose.msra.mxu0 0.0
        %910 = vmatprep.subr.mxu0 0.0
        %911 = vmatpush1.xpose.msra.mxu0 0.0
        %912 = vmatprep.subr.mxu0 0.0
        %913 = vmatpush1.xpose.msra.mxu0 0.0
        %914 = vmatprep.subr.mxu0 0.0
        %915 = vmatpush1.xpose.msra.mxu0 0.0
        %916 = vmatprep.subr.mxu0 0.0
        %917 = vmatpush1.xpose.msra.mxu0 0.0
        %918 = vmatprep.subr.mxu0 0.0
        %919 = vmatpush1.xpose.msra.mxu0 0.0
        %920 = vmatprep.subr.mxu0 0.0
        %921 = vmatpush1.xpose.msra.mxu0 0.0
        %922 = vmatprep.subr.mxu0 0.0
        %923 = vmatpush1.xpose.msra.mxu0 0.0
        %924 = vmatprep.subr.mxu0 0.0
        %925 = vmatpush1.xpose.msra.mxu0 0.0
        %926 = vmatprep.subr.mxu0 0.0
        %927 = vmatpush1.xpose.msra.mxu0 0.0
        %928 = vmatprep.subr.mxu0 0.0
        %929 = vmatpush1.xpose.msra.mxu0 0.0
        %930 = vmatprep.subr.mxu0 0.0
        %931 = vmatpush1.xpose.msra.mxu0 0.0
        %932 = vmatprep.subr.mxu0 0.0
        %933 = vmatpush1.xpose.msra.mxu0 0.0
        %934 = vmatprep.subr.mxu0 0.0
        %935 = vmatpush1.xpose.msra.mxu0 0.0
        %936 = vmatprep.subr.mxu0 0.0
        %937 = vmatpush1.xpose.msra.mxu0 0.0
        %938 = vmatprep.subr.mxu0 0.0
        %939 = vmatpush1.xpose.msra.mxu0 0.0
        %940 = vmatprep.subr.mxu0 0.0
        %941 = vmatpush1.xpose.msra.mxu0 0.0
        %942 = vmatprep.subr.mxu0 0.0
        %943 = vmatpush1.xpose.msra.mxu0 0.0
        %944 = vmatprep.subr.mxu0 0.0
        %945 = vmatpush1.xpose.msra.mxu0 0.0
        %946 = vmatprep.subr.mxu0 0.0
        %947 = vmatpush1.xpose.msra.mxu0 0.0
        %948 = vmatprep.subr.mxu0 0.0
        %949 = vmatpush1.xpose.msra.mxu0 0.0
        %950 = vmatprep.subr.mxu0 0.0
        %951 = vmatpush1.xpose.msra.mxu0 0.0
        %952 = vmatprep.subr.mxu0 0.0
        %953 = vmatpush1.xpose.msra.mxu0 0.0
        %954 = vmatprep.subr.mxu0 0.0
        %955 = vmatpush1.xpose.msra.mxu0 0.0
        %956 = vmatprep.subr.mxu0 0.0
        %957 = vmatpush1.xpose.msra.mxu0 0.0
        %958 = vmatprep.subr.mxu0 0.0
        %959 = vmatpush1.xpose.msra.mxu0 0.0
        %960 = vmatprep.subr.mxu0 0.0
        %961 = vmatpush1.xpose.msra.mxu0 0.0
        %962 = vmatprep.mubr.f32.mxu0 0.0
        %963 = vmatmul.mubr.f32.gmra.mrb[0].mxu0 %v890
        %v964 = vpop.f32.mrb[0].mxu0
        %v965 = vadd.f32 0.0, %v964
        %v966 = vpop.f32.mrb[0].mxu0
        %967 = vmatprep.mubr.f32.mxu0 0.0
        %968 = vmatmul.mubr.f32.gmra.mrb[0].mxu0 %v892
        %v969 = vpop.f32.mrb[0].mxu0
        %v970 = vadd.f32 0.0, %v969
        %v971 = vpop.f32.mrb[0].mxu0
        %972 = vdwg.mxu0
        %v973 = vsel %vm778, %v965, -inf
        %974 = vmax.xlane.f32.xlu0 %v973
        %v975 = vpop.xlane.xlu0 %974
        %v976 = vsel %vm778, %v970, -inf
        %977 = vmax.xlane.f32.xlu0 %v976
        %v978 = vpop.xlane.xlu0 %977
        %v979 = vsub.f32 %v965, %v975
        %v980 = vsub.f32 %v970, %v978
        %v981 = vmul.f32 %v979, 1.442695
        %v982 = vpow.pop %v981
        %v983 = vmul.f32 %v980, 1.442695
        %v984 = vpow.pop %v983
        %v985 = vsel %vm778, %v982, 0.0
        %986 = vadd.xlane.f32.xlu0 %v985
        %v987 = vpop.xlane.xlu0 %986
        %v988 = vsel %vm778, %v984, 0.0
        %989 = vadd.xlane.f32.xlu0 %v988
        %v990 = vpop.xlane.xlu0 %989
        %v991 = vrcp.pop %v987
        %v992 = vmul.f32 %v982, %v991
        %v993 = vrcp.pop %v990
        %v994 = vmul.f32 %v984, %v993
        %997 = vrot.lane.b32.xlu0 %v601, 120
        %v998 = vpop.permute.xlu0 %997
        %999 = vrot.lane.b32.xlu0 %v606, 120
        %v1000 = vpop.permute.xlu0 %999
        %v1004 = vsel %vm778, %v992, 0
        %v1007 = vsel %vm778, %v994, 0
        %1009 = vmatprep.subr.mxu0 0.0
        %1010 = vmatpush1.msra.mxu0 %v998
        %1011 = vmatprep.subr.mxu0 0.0
        %1012 = vmatpush1.msra.mxu0 %v1000
        %1013 = vmatprep.subr.mxu0 0.0
        %1014 = vmatpush1.msra.mxu0 0.0
        %1015 = vmatprep.subr.mxu0 0.0
        %1016 = vmatpush1.msra.mxu0 0.0
        %1017 = vmatprep.subr.mxu0 0.0
        %1018 = vmatpush1.msra.mxu0 0.0
        %1019 = vmatprep.subr.mxu0 0.0
        %1020 = vmatpush1.msra.mxu0 0.0
        %1021 = vmatprep.subr.mxu0 0.0
        %1022 = vmatpush1.msra.mxu0 0.0
        %1023 = vmatprep.subr.mxu0 0.0
        %1024 = vmatpush1.msra.mxu0 0.0
        %1025 = vmatprep.subr.mxu0 0.0
        %1026 = vmatpush1.msra.mxu0 0.0
        %1027 = vmatprep.subr.mxu0 0.0
        %1028 = vmatpush1.msra.mxu0 0.0
        %1029 = vmatprep.subr.mxu0 0.0
        %1030 = vmatpush1.msra.mxu0 0.0
        %1031 = vmatprep.subr.mxu0 0.0
        %1032 = vmatpush1.msra.mxu0 0.0
        %1033 = vmatprep.subr.mxu0 0.0
        %1034 = vmatpush1.msra.mxu0 0.0
        %1035 = vmatprep.subr.mxu0 0.0
        %1036 = vmatpush1.msra.mxu0 0.0
        %1037 = vmatprep.subr.mxu0 0.0
        %1038 = vmatpush1.msra.mxu0 0.0
        %1039 = vmatprep.subr.mxu0 0.0
        %1040 = vmatpush1.msra.mxu0 0.0
        %1041 = vmatprep.subr.mxu0 0.0
        %1042 = vmatpush1.msra.mxu0 0.0
        %1043 = vmatprep.subr.mxu0 0.0
        %1044 = vmatpush1.msra.mxu0 0.0
        %1045 = vmatprep.subr.mxu0 0.0
        %1046 = vmatpush1.msra.mxu0 0.0
        %1047 = vmatprep.subr.mxu0 0.0
        %1048 = vmatpush1.msra.mxu0 0.0
        %1049 = vmatprep.subr.mxu0 0.0
        %1050 = vmatpush1.msra.mxu0 0.0
        %1051 = vmatprep.subr.mxu0 0.0
        %1052 = vmatpush1.msra.mxu0 0.0
        %1053 = vmatprep.subr.mxu0 0.0
        %1054 = vmatpush1.msra.mxu0 0.0
        %1055 = vmatprep.subr.mxu0 0.0
        %1056 = vmatpush1.msra.mxu0 0.0
        %1057 = vmatprep.subr.mxu0 0.0
        %1058 = vmatpush1.msra.mxu0 0.0
        %1059 = vmatprep.subr.mxu0 0.0
        %1060 = vmatpush1.msra.mxu0 0.0
        %1061 = vmatprep.subr.mxu0 0.0
        %1062 = vmatpush1.msra.mxu0 0.0
        %1063 = vmatprep.subr.mxu0 0.0
        %1064 = vmatpush1.msra.mxu0 0.0
        %1065 = vmatprep.subr.mxu0 0.0
        %1066 = vmatpush1.msra.mxu0 0.0
        %1067 = vmatprep.subr.mxu0 0.0
        %1068 = vmatpush1.msra.mxu0 0.0
        %1069 = vmatprep.subr.mxu0 0.0
        %1070 = vmatpush1.msra.mxu0 0.0
        %1071 = vmatprep.subr.mxu0 0.0
        %1072 = vmatpush1.msra.mxu0 0.0
        %1073 = vmatprep.mubr.f32.mxu0 0.0
        %1074 = vmatmul.mubr.f32.gmra.mrb[0].mxu0 %v1004
        %v1075 = vpop.f32.mrb[0].mxu0
        %v1076 = vadd.f32 0.0, %v1075
        %v1077 = vpop.f32.mrb[0].mxu0
        %1078 = vmatprep.mubr.f32.mxu0 0.0
        %1079 = vmatmul.mubr.f32.gmra.mrb[0].mxu0 %v1007
        %v1080 = vpop.f32.mrb[0].mxu0
        %v1081 = vadd.f32 0.0, %v1080
        %v1082 = vpop.f32.mrb[0].mxu0
        %1083 = vdwg.mxu0
        %1084 = vrot.lane.b32.xlu0 %v688, 112
        %v1085 = vpop.permute.xlu0 %1084
        %1086 = vrot.lane.b32.xlu0 %v689, 112
        %v1087 = vpop.permute.xlu0 %1086
        %1088 = vrot.lane.b32.xlu0 %v522, 112
        %v1089 = vpop.permute.xlu0 %1088
        %1090 = vrot.lane.b32.xlu0 %v527, 112
        %v1091 = vpop.permute.xlu0 %1090
        %v1092 = vsel %vm690, %v1085, 0
        %v1094 = vsel %vm690, %v1087, 0
        %v1096 = vsel %vm690, %v1089, 0
        %v1098 = vsel %vm690, %v1091, 0
        %1100 = vmatprep.subr.mxu0 0.0
        %1101 = vmatpush1.xpose.msra.mxu0 %v1096
        %1102 = vmatprep.subr.mxu0 0.0
        %1103 = vmatpush1.xpose.msra.mxu0 %v1098
        %1104 = vmatprep.subr.mxu0 0.0
        %1105 = vmatpush1.xpose.msra.mxu0 0.0
        %1106 = vmatprep.subr.mxu0 0.0
        %1107 = vmatpush1.xpose.msra.mxu0 0.0
        %1108 = vmatprep.subr.mxu0 0.0
        %1109 = vmatpush1.xpose.msra.mxu0 0.0
        %1110 = vmatprep.subr.mxu0 0.0
        %1111 = vmatpush1.xpose.msra.mxu0 0.0
        %1112 = vmatprep.subr.mxu0 0.0
        %1113 = vmatpush1.xpose.msra.mxu0 0.0
        %1114 = vmatprep.subr.mxu0 0.0
        %1115 = vmatpush1.xpose.msra.mxu0 0.0
        %1116 = vmatprep.subr.mxu0 0.0
        %1117 = vmatpush1.xpose.msra.mxu0 0.0
        %1118 = vmatprep.subr.mxu0 0.0
        %1119 = vmatpush1.xpose.msra.mxu0 0.0
        %1120 = vmatprep.subr.mxu0 0.0
        %1121 = vmatpush1.xpose.msra.mxu0 0.0
        %1122 = vmatprep.subr.mxu0 0.0
        %1123 = vmatpush1.xpose.msra.mxu0 0.0
        %1124 = vmatprep.subr.mxu0 0.0
        %1125 = vmatpush1.xpose.msra.mxu0 0.0
        %1126 = vmatprep.subr.mxu0 0.0
        %1127 = vmatpush1.xpose.msra.mxu0 0.0
        %1128 = vmatprep.subr.mxu0 0.0
        %1129 = vmatpush1.xpose.msra.mxu0 0.0
        %1130 = vmatprep.subr.mxu0 0.0
        %1131 = vmatpush1.xpose.msra.mxu0 0.0
        %1132 = vmatprep.subr.mxu0 0.0
        %1133 = vmatpush1.xpose.msra.mxu0 0.0
        %1134 = vmatprep.subr.mxu0 0.0
        %1135 = vmatpush1.xpose.msra.mxu0 0.0
        %1136 = vmatprep.subr.mxu0 0.0
        %1137 = vmatpush1.xpose.msra.mxu0 0.0
        %1138 = vmatprep.subr.mxu0 0.0
        %1139 = vmatpush1.xpose.msra.mxu0 0.0
        %1140 = vmatprep.subr.mxu0 0.0
        %1141 = vmatpush1.xpose.msra.mxu0 0.0
        %1142 = vmatprep.subr.mxu0 0.0
        %1143 = vmatpush1.xpose.msra.mxu0 0.0
        %1144 = vmatprep.subr.mxu0 0.0
        %1145 = vmatpush1.xpose.msra.mxu0 0.0
        %1146 = vmatprep.subr.mxu0 0.0
        %1147 = vmatpush1.xpose.msra.mxu0 0.0
        %1148 = vmatprep.subr.mxu0 0.0
        %1149 = vmatpush1.xpose.msra.mxu0 0.0
        %1150 = vmatprep.subr.mxu0 0.0
        %1151 = vmatpush1.xpose.msra.mxu0 0.0
        %1152 = vmatprep.subr.mxu0 0.0
        %1153 = vmatpush1.xpose.msra.mxu0 0.0
        %1154 = vmatprep.subr.mxu0 0.0
        %1155 = vmatpush1.xpose.msra.mxu0 0.0
        %1156 = vmatprep.subr.mxu0 0.0
        %1157 = vmatpush1.xpose.msra.mxu0 0.0
        %1158 = vmatprep.subr.mxu0 0.0
        %1159 = vmatpush1.xpose.msra.mxu0 0.0
        %1160 = vmatprep.subr.mxu0 0.0
        %1161 = vmatpush1.xpose.msra.mxu0 0.0
        %1162 = vmatprep.subr.mxu0 0.0
        %1163 = vmatpush1.xpose.msra.mxu0 0.0
        %1164 = vmatprep.mubr.f32.mxu0 0.0
        %1165 = vmatmul.mubr.f32.gmra.mrb[0].mxu0 %v1092
        %v1166 = vpop.f32.mrb[0].mxu0
        %v1167 = vadd.f32 0.0, %v1166
        %v1168 = vpop.f32.mrb[0].mxu0
        %1169 = vmatprep.mubr.f32.mxu0 0.0
        %1170 = vmatmul.mubr.f32.gmra.mrb[0].mxu0 %v1094
        %v1171 = vpop.f32.mrb[0].mxu0
        %v1172 = vadd.f32 0.0, %v1171
        %v1173 = vpop.f32.mrb[0].mxu0
        %1174 = vdwg.mxu0
        %v1175 = vsel %vm778, %v1167, -inf
        %1176 = vmax.xlane.f32.xlu0 %v1175
        %v1177 = vpop.xlane.xlu0 %1176
        %v1178 = vsel %vm778, %v1172, -inf
        %1179 = vmax.xlane.f32.xlu0 %v1178
        %v1180 = vpop.xlane.xlu0 %1179
        %v1181 = vsub.f32 %v1167, %v1177
        %v1182 = vsub.f32 %v1172, %v1180
        %v1183 = vmul.f32 %v1181, 1.442695
        %v1184 = vpow.pop %v1183
        %v1185 = vmul.f32 %v1182, 1.442695
        %v1186 = vpow.pop %v1185
        %v1187 = vsel %vm778, %v1184, 0.0
        %1188 = vadd.xlane.f32.xlu0 %v1187
        %v1189 = vpop.xlane.xlu0 %1188
        %v1190 = vsel %vm778, %v1186, 0.0
        %1191 = vadd.xlane.f32.xlu0 %v1190
        %v1192 = vpop.xlane.xlu0 %1191
        %v1193 = vrcp.pop %v1189
        %v1194 = vmul.f32 %v1184, %v1193
        %v1195 = vrcp.pop %v1192
        %v1196 = vmul.f32 %v1186, %v1195
        %1197 = vrot.lane.b32.xlu0 %v601, 112
        %v1198 = vpop.permute.xlu0 %1197
        %1199 = vrot.lane.b32.xlu0 %v606, 112
        %v1200 = vpop.permute.xlu0 %1199
        %v1204 = vsel %vm778, %v1194, 0
        %v1207 = vsel %vm778, %v1196, 0
        %1209 = vmatprep.subr.mxu0 0.0
        %1210 = vmatpush1.msra.mxu0 %v1198
        %1211 = vmatprep.subr.mxu0 0.0
        %1212 = vmatpush1.msra.mxu0 %v1200
        %1213 = vmatprep.subr.mxu0 0.0
        %1214 = vmatpush1.msra.mxu0 0.0
        %1215 = vmatprep.subr.mxu0 0.0
        %1216 = vmatpush1.msra.mxu0 0.0
        %1217 = vmatprep.subr.mxu0 0.0
        %1218 = vmatpush1.msra.mxu0 0.0
        %1219 = vmatprep.subr.mxu0 0.0
        %1220 = vmatpush1.msra.mxu0 0.0
        %1221 = vmatprep.subr.mxu0 0.0
        %1222 = vmatpush1.msra.mxu0 0.0
        %1223 = vmatprep.subr.mxu0 0.0
        %1224 = vmatpush1.msra.mxu0 0.0
        %1225 = vmatprep.subr.mxu0 0.0
        %1226 = vmatpush1.msra.mxu0 0.0
        %1227 = vmatprep.subr.mxu0 0.0
        %1228 = vmatpush1.msra.mxu0 0.0
        %1229 = vmatprep.subr.mxu0 0.0
        %1230 = vmatpush1.msra.mxu0 0.0
        %1231 = vmatprep.subr.mxu0 0.0
        %1232 = vmatpush1.msra.mxu0 0.0
        %1233 = vmatprep.subr.mxu0 0.0
        %1234 = vmatpush1.msra.mxu0 0.0
        %1235 = vmatprep.subr.mxu0 0.0
        %1236 = vmatpush1.msra.mxu0 0.0
        %1237 = vmatprep.subr.mxu0 0.0
        %1238 = vmatpush1.msra.mxu0 0.0
        %1239 = vmatprep.subr.mxu0 0.0
        %1240 = vmatpush1.msra.mxu0 0.0
        %1241 = vmatprep.subr.mxu0 0.0
        %1242 = vmatpush1.msra.mxu0 0.0
        %1243 = vmatprep.subr.mxu0 0.0
        %1244 = vmatpush1.msra.mxu0 0.0
        %1245 = vmatprep.subr.mxu0 0.0
        %1246 = vmatpush1.msra.mxu0 0.0
        %1247 = vmatprep.subr.mxu0 0.0
        %1248 = vmatpush1.msra.mxu0 0.0
        %1249 = vmatprep.subr.mxu0 0.0
        %1250 = vmatpush1.msra.mxu0 0.0
        %1251 = vmatprep.subr.mxu0 0.0
        %1252 = vmatpush1.msra.mxu0 0.0
        %1253 = vmatprep.subr.mxu0 0.0
        %1254 = vmatpush1.msra.mxu0 0.0
        %1255 = vmatprep.subr.mxu0 0.0
        %1256 = vmatpush1.msra.mxu0 0.0
        %1257 = vmatprep.subr.mxu0 0.0
        %1258 = vmatpush1.msra.mxu0 0.0
        %1259 = vmatprep.subr.mxu0 0.0
        %1260 = vmatpush1.msra.mxu0 0.0
        %1261 = vmatprep.subr.mxu0 0.0
        %1262 = vmatpush1.msra.mxu0 0.0
        %1263 = vmatprep.subr.mxu0 0.0
        %1264 = vmatpush1.msra.mxu0 0.0
        %1265 = vmatprep.subr.mxu0 0.0
        %1266 = vmatpush1.msra.mxu0 0.0
        %1267 = vmatprep.subr.mxu0 0.0
        %1268 = vmatpush1.msra.mxu0 0.0
        %1269 = vmatprep.subr.mxu0 0.0
        %1270 = vmatpush1.msra.mxu0 0.0
        %1271 = vmatprep.subr.mxu0 0.0
        %1272 = vmatpush1.msra.mxu0 0.0
        %1273 = vmatprep.mubr.f32.mxu0 0.0
        %1274 = vmatmul.mubr.f32.gmra.mrb[0].mxu0 %v1204
        %v1275 = vpop.f32.mrb[0].mxu0
        %v1276 = vadd.f32 0.0, %v1275
        %v1277 = vpop.f32.mrb[0].mxu0
        %1278 = vmatprep.mubr.f32.mxu0 0.0
        %1279 = vmatmul.mubr.f32.gmra.mrb[0].mxu0 %v1207
        %v1280 = vpop.f32.mrb[0].mxu0
        %v1281 = vadd.f32 0.0, %v1280
        %v1282 = vpop.f32.mrb[0].mxu0
        %1283 = vdwg.mxu0
        %1284 = vrot.lane.b32.xlu0 %v688, 104
        %v1285 = vpop.permute.xlu0 %1284
        %1286 = vrot.lane.b32.xlu0 %v689, 104
        %v1287 = vpop.permute.xlu0 %1286
        %1288 = vrot.lane.b32.xlu0 %v522, 104
        %v1289 = vpop.permute.xlu0 %1288
        %1290 = vrot.lane.b32.xlu0 %v527, 104
        %v1291 = vpop.permute.xlu0 %1290
        %v1292 = vsel %vm690, %v1285, 0
        %v1294 = vsel %vm690, %v1287, 0
        %v1296 = vsel %vm690, %v1289, 0
        %v1298 = vsel %vm690, %v1291, 0
        %1300 = vmatprep.subr.mxu0 0.0
        %1301 = vmatpush1.xpose.msra.mxu0 %v1296
        %1302 = vmatprep.subr.mxu0 0.0
        %1303 = vmatpush1.xpose.msra.mxu0 %v1298
        %1304 = vmatprep.subr.mxu0 0.0
        %1305 = vmatpush1.xpose.msra.mxu0 0.0
        %1306 = vmatprep.subr.mxu0 0.0
        %1307 = vmatpush1.xpose.msra.mxu0 0.0
        %1308 = vmatprep.subr.mxu0 0.0
        %1309 = vmatpush1.xpose.msra.mxu0 0.0
        %1310 = vmatprep.subr.mxu0 0.0
        %1311 = vmatpush1.xpose.msra.mxu0 0.0
        %1312 = vmatprep.subr.mxu0 0.0
        %1313 = vmatpush1.xpose.msra.mxu0 0.0
        %1314 = vmatprep.subr.mxu0 0.0
        %1315 = vmatpush1.xpose.msra.mxu0 0.0
        %1316 = vmatprep.subr.mxu0 0.0
        %1317 = vmatpush1.xpose.msra.mxu0 0.0
        %1318 = vmatprep.subr.mxu0 0.0
        %1319 = vmatpush1.xpose.msra.mxu0 0.0
        %1320 = vmatprep.subr.mxu0 0.0
        %1321 = vmatpush1.xpose.msra.mxu0 0.0
        %1322 = vmatprep.subr.mxu0 0.0
        %1323 = vmatpush1.xpose.msra.mxu0 0.0
        %1324 = vmatprep.subr.mxu0 0.0
        %1325 = vmatpush1.xpose.msra.mxu0 0.0
        %1326 = vmatprep.subr.mxu0 0.0
        %1327 = vmatpush1.xpose.msra.mxu0 0.0
        %1328 = vmatprep.subr.mxu0 0.0
        %1329 = vmatpush1.xpose.msra.mxu0 0.0
        %1330 = vmatprep.subr.mxu0 0.0
        %1331 = vmatpush1.xpose.msra.mxu0 0.0
        %1332 = vmatprep.subr.mxu0 0.0
        %1333 = vmatpush1.xpose.msra.mxu0 0.0
        %1334 = vmatprep.subr.mxu0 0.0
        %1335 = vmatpush1.xpose.msra.mxu0 0.0
        %1336 = vmatprep.subr.mxu0 0.0
        %1337 = vmatpush1.xpose.msra.mxu0 0.0
        %1338 = vmatprep.subr.mxu0 0.0
        %1339 = vmatpush1.xpose.msra.mxu0 0.0
        %1340 = vmatprep.subr.mxu0 0.0
        %1341 = vmatpush1.xpose.msra.mxu0 0.0
        %1342 = vmatprep.subr.mxu0 0.0
        %1343 = vmatpush1.xpose.msra.mxu0 0.0
        %1344 = vmatprep.subr.mxu0 0.0
        %1345 = vmatpush1.xpose.msra.mxu0 0.0
        %1346 = vmatprep.subr.mxu0 0.0
        %1347 = vmatpush1.xpose.msra.mxu0 0.0
        %1348 = vmatprep.subr.mxu0 0.0
        %1349 = vmatpush1.xpose.msra.mxu0 0.0
        %1350 = vmatprep.subr.mxu0 0.0
        %1351 = vmatpush1.xpose.msra.mxu0 0.0
        %1352 = vmatprep.subr.mxu0 0.0
        %1353 = vmatpush1.xpose.msra.mxu0 0.0
        %1354 = vmatprep.subr.mxu0 0.0
        %1355 = vmatpush1.xpose.msra.mxu0 0.0
        %1356 = vmatprep.subr.mxu0 0.0
        %1357 = vmatpush1.xpose.msra.mxu0 0.0
        %1358 = vmatprep.subr.mxu0 0.0
        %1359 = vmatpush1.xpose.msra.mxu0 0.0
        %1360 = vmatprep.subr.mxu0 0.0
        %1361 = vmatpush1.xpose.msra.mxu0 0.0
        %1362 = vmatprep.subr.mxu0 0.0
        %1363 = vmatpush1.xpose.msra.mxu0 0.0
        %1364 = vmatprep.mubr.f32.mxu0 0.0
        %1365 = vmatmul.mubr.f32.gmra.mrb[0].mxu0 %v1292
        %v1366 = vpop.f32.mrb[0].mxu0
        %v1367 = vadd.f32 0.0, %v1366
        %v1368 = vpop.f32.mrb[0].mxu0
        %1369 = vmatprep.mubr.f32.mxu0 0.0
        %1370 = vmatmul.mubr.f32.gmra.mrb[0].mxu0 %v1294
        %v1371 = vpop.f32.mrb[0].mxu0
        %v1372 = vadd.f32 0.0, %v1371
        %v1373 = vpop.f32.mrb[0].mxu0
        %1374 = vdwg.mxu0
        %v1375 = vsel %vm778, %v1367, -inf
        %1376 = vmax.xlane.f32.xlu0 %v1375
        %v1377 = vpop.xlane.xlu0 %1376
        %v1378 = vsel %vm778, %v1372, -inf
        %1379 = vmax.xlane.f32.xlu0 %v1378
        %v1380 = vpop.xlane.xlu0 %1379
        %v1381 = vsub.f32 %v1367, %v1377
        %v1382 = vsub.f32 %v1372, %v1380
        %v1383 = vmul.f32 %v1381, 1.442695
        %v1384 = vpow.pop %v1383
        %v1385 = vmul.f32 %v1382, 1.442695
        %v1386 = vpow.pop %v1385
        %v1387 = vsel %vm778, %v1384, 0.0
        %1388 = vadd.xlane.f32.xlu0 %v1387
        %v1389 = vpop.xlane.xlu0 %1388
        %v1390 = vsel %vm778, %v1386, 0.0
        %1391 = vadd.xlane.f32.xlu0 %v1390
        %v1392 = vpop.xlane.xlu0 %1391
        %v1393 = vrcp.pop %v1389
        %v1394 = vmul.f32 %v1384, %v1393
        %v1395 = vrcp.pop %v1392
        %v1396 = vmul.f32 %v1386, %v1395
        %1397 = vrot.lane.b32.xlu0 %v601, 104
        %v1398 = vpop.permute.xlu0 %1397
        %1399 = vrot.lane.b32.xlu0 %v606, 104
        %v1400 = vpop.permute.xlu0 %1399
        %v1404 = vsel %vm778, %v1394, 0
        %v1407 = vsel %vm778, %v1396, 0
        %1409 = vmatprep.subr.mxu0 0.0
        %1410 = vmatpush1.msra.mxu0 %v1398
        %1411 = vmatprep.subr.mxu0 0.0
        %1412 = vmatpush1.msra.mxu0 %v1400
        %1413 = vmatprep.subr.mxu0 0.0
        %1414 = vmatpush1.msra.mxu0 0.0
        %1415 = vmatprep.subr.mxu0 0.0
        %1416 = vmatpush1.msra.mxu0 0.0
        %1417 = vmatprep.subr.mxu0 0.0
        %1418 = vmatpush1.msra.mxu0 0.0
        %1419 = vmatprep.subr.mxu0 0.0
        %1420 = vmatpush1.msra.mxu0 0.0
        %1421 = vmatprep.subr.mxu0 0.0
        %1422 = vmatpush1.msra.mxu0 0.0
        %1423 = vmatprep.subr.mxu0 0.0
        %1424 = vmatpush1.msra.mxu0 0.0
        %1425 = vmatprep.subr.mxu0 0.0
        %1426 = vmatpush1.msra.mxu0 0.0
        %1427 = vmatprep.subr.mxu0 0.0
        %1428 = vmatpush1.msra.mxu0 0.0
        %1429 = vmatprep.subr.mxu0 0.0
        %1430 = vmatpush1.msra.mxu0 0.0
        %1431 = vmatprep.subr.mxu0 0.0
        %1432 = vmatpush1.msra.mxu0 0.0
        %1433 = vmatprep.subr.mxu0 0.0
        %1434 = vmatpush1.msra.mxu0 0.0
        %1435 = vmatprep.subr.mxu0 0.0
        %1436 = vmatpush1.msra.mxu0 0.0
        %1437 = vmatprep.subr.mxu0 0.0
        %1438 = vmatpush1.msra.mxu0 0.0
        %1439 = vmatprep.subr.mxu0 0.0
        %1440 = vmatpush1.msra.mxu0 0.0
        %1441 = vmatprep.subr.mxu0 0.0
        %1442 = vmatpush1.msra.mxu0 0.0
        %1443 = vmatprep.subr.mxu0 0.0
        %1444 = vmatpush1.msra.mxu0 0.0
        %1445 = vmatprep.subr.mxu0 0.0
        %1446 = vmatpush1.msra.mxu0 0.0
        %1447 = vmatprep.subr.mxu0 0.0
        %1448 = vmatpush1.msra.mxu0 0.0
        %1449 = vmatprep.subr.mxu0 0.0
        %1450 = vmatpush1.msra.mxu0 0.0
        %1451 = vmatprep.subr.mxu0 0.0
        %1452 = vmatpush1.msra.mxu0 0.0
        %1453 = vmatprep.subr.mxu0 0.0
        %1454 = vmatpush1.msra.mxu0 0.0
        %1455 = vmatprep.subr.mxu0 0.0
        %1456 = vmatpush1.msra.mxu0 0.0
        %1457 = vmatprep.subr.mxu0 0.0
        %1458 = vmatpush1.msra.mxu0 0.0
        %1459 = vmatprep.subr.mxu0 0.0
        %1460 = vmatpush1.msra.mxu0 0.0
        %1461 = vmatprep.subr.mxu0 0.0
        %1462 = vmatpush1.msra.mxu0 0.0
        %1463 = vmatprep.subr.mxu0 0.0
        %1464 = vmatpush1.msra.mxu0 0.0
        %1465 = vmatprep.subr.mxu0 0.0
        %1466 = vmatpush1.msra.mxu0 0.0
        %1467 = vmatprep.subr.mxu0 0.0
        %1468 = vmatpush1.msra.mxu0 0.0
        %1469 = vmatprep.subr.mxu0 0.0
        %1470 = vmatpush1.msra.mxu0 0.0
        %1471 = vmatprep.subr.mxu0 0.0
        %1472 = vmatpush1.msra.mxu0 0.0
        %1473 = vmatprep.mubr.f32.mxu0 0.0
        %1474 = vmatmul.mubr.f32.gmra.mrb[0].mxu0 %v1404
        %v1475 = vpop.f32.mrb[0].mxu0
        %v1476 = vadd.f32 0.0, %v1475
        %v1477 = vpop.f32.mrb[0].mxu0
        %1478 = vmatprep.mubr.f32.mxu0 0.0
        %1479 = vmatmul.mubr.f32.gmra.mrb[0].mxu0 %v1407
        %v1480 = vpop.f32.mrb[0].mxu0
        %v1481 = vadd.f32 0.0, %v1480
        %v1482 = vpop.f32.mrb[0].mxu0
        %1483 = vdwg.mxu0
        %1486 = vrot.lane.b32.xlu0 %v1076, 8
        %v1487 = vpop.permute.xlu0 %1486
        %1488 = vrot.lane.b32.xlu0 %v1081, 8
        %v1489 = vpop.permute.xlu0 %1488
        %1494 = vrot.lane.b32.xlu0 %v1276, 16
        %v1495 = vpop.permute.xlu0 %1494
        %1496 = vrot.lane.b32.xlu0 %v1281, 16
        %v1497 = vpop.permute.xlu0 %1496
        %1502 = vrot.lane.b32.xlu0 %v1476, 24
        %v1503 = vpop.permute.xlu0 %1502
        %1504 = vrot.lane.b32.xlu0 %v1481, 24
        %v1505 = vpop.permute.xlu0 %1504
        %v1508 = vsel %vm690, %v874, %v1487
        %v1509 = vsel %vm690, %v879, %v1489
        %v1510 = vsel %vm778, %v1508, %v1495
        %v1511 = vsel %vm778, %v1509, %v1497
        %vm1512 = vcmask 195584
        %v1513 = vsel %vm1512, %v1510, %v1503
        %v1514 = vsel %vm1512, %v1511, %v1505
        %v1515 = vld [vmem:[#allocation11] sm:$0xff]
        %v1516 = vld [vmem:[#allocation11 + $0x8] sm:$0xff]
        %v1517 = vld [vmem:[#allocation11 + $0x10] sm:$0xff]
        %v1518 = vld [vmem:[#allocation11 + $0x18] sm:$0xff]
        %v1519 = vld [vmem:[%s7] sm:$0x1]
        %v1521 = vlaneseq
        %v1522 = vshrl.u32 %v1521, 7
        %v1523 = vsub.s32 0, %v1522
        %v1524 = vrot.slane %v1519, %v1523
        %v1527 = vsel %vm448, %v1513, 0
        %v1530 = vsel %vm448, %v1514, 0
        %1532 = vmatprep.subr.mxu0 0.0
        %1533 = vmatpush1.msra.mxu0 %v1515
        %1534 = vmatprep.subr.mxu0 0.0
        %1535 = vmatpush1.msra.mxu0 %v1516
        %1536 = vmatprep.subr.mxu0 0.0
        %1537 = vmatpush1.msra.mxu0 %v1517
        %1538 = vmatprep.subr.mxu0 0.0
        %1539 = vmatpush1.msra.mxu0 %v1518
        %1540 = vmatprep.subr.mxu0 0.0
        %1541 = vmatpush1.msra.mxu0 0.0
        %1542 = vmatprep.subr.mxu0 0.0
        %1543 = vmatpush1.msra.mxu0 0.0
        %1544 = vmatprep.subr.mxu0 0.0
        %1545 = vmatpush1.msra.mxu0 0.0
        %1546 = vmatprep.subr.mxu0 0.0
        %1547 = vmatpush1.msra.mxu0 0.0
        %1548 = vmatprep.subr.mxu0 0.0
        %1549 = vmatpush1.msra.mxu0 0.0
        %1550 = vmatprep.subr.mxu0 0.0
        %1551 = vmatpush1.msra.mxu0 0.0
        %1552 = vmatprep.subr.mxu0 0.0
        %1553 = vmatpush1.msra.mxu0 0.0
        %1554 = vmatprep.subr.mxu0 0.0
        %1555 = vmatpush1.msra.mxu0 0.0
        %1556 = vmatprep.subr.mxu0 0.0
        %1557 = vmatpush1.msra.mxu0 0.0
        %1558 = vmatprep.subr.mxu0 0.0
        %1559 = vmatpush1.msra.mxu0 0.0
        %1560 = vmatprep.subr.mxu0 0.0
        %1561 = vmatpush1.msra.mxu0 0.0
        %1562 = vmatprep.subr.mxu0 0.0
        %1563 = vmatpush1.msra.mxu0 0.0
        %1564 = vmatprep.subr.mxu0 0.0
        %1565 = vmatpush1.msra.mxu0 0.0
        %1566 = vmatprep.subr.mxu0 0.0
        %1567 = vmatpush1.msra.mxu0 0.0
        %1568 = vmatprep.subr.mxu0 0.0
        %1569 = vmatpush1.msra.mxu0 0.0
        %1570 = vmatprep.subr.mxu0 0.0
        %1571 = vmatpush1.msra.mxu0 0.0
        %1572 = vmatprep.subr.mxu0 0.0
        %1573 = vmatpush1.msra.mxu0 0.0
        %1574 = vmatprep.subr.mxu0 0.0
        %1575 = vmatpush1.msra.mxu0 0.0
        %1576 = vmatprep.subr.mxu0 0.0
        %1577 = vmatpush1.msra.mxu0 0.0
        %1578 = vmatprep.subr.mxu0 0.0
        %1579 = vmatpush1.msra.mxu0 0.0
        %1580 = vmatprep.subr.mxu0 0.0
        %1581 = vmatpush1.msra.mxu0 0.0
        %1582 = vmatprep.subr.mxu0 0.0
        %1583 = vmatpush1.msra.mxu0 0.0
        %1584 = vmatprep.subr.mxu0 0.0
        %1585 = vmatpush1.msra.mxu0 0.0
        %1586 = vmatprep.subr.mxu0 0.0
        %1587 = vmatpush1.msra.mxu0 0.0
        %1588 = vmatprep.subr.mxu0 0.0
        %1589 = vmatpush1.msra.mxu0 0.0
        %1590 = vmatprep.subr.mxu0 0.0
        %1591 = vmatpush1.msra.mxu0 0.0
        %1592 = vmatprep.subr.mxu0 0.0
        %1593 = vmatpush1.msra.mxu0 0.0
        %1594 = vmatprep.subr.mxu0 0.0
        %1595 = vmatpush1.msra.mxu0 0.0
        %1596 = vmatprep.mubr.f32.mxu0 0.0
        %1597 = vmatmul.mubr.f32.gmra.mrb[0].mxu0 %v1527
        %v1598 = vpop.f32.mrb[0].mxu0
        %v1599 = vadd.f32 %v1524, %v1598
        %v1600 = vpop.f32.mrb[0].mxu0
        %1601 = vmatprep.mubr.f32.mxu0 0.0
        %1602 = vmatmul.mubr.f32.gmra.mrb[0].mxu0 %v1530
        %v1603 = vpop.f32.mrb[0].mxu0
        %v1604 = vadd.f32 %v1524, %v1603
        %v1605 = vpop.f32.mrb[0].mxu0
        %1606 = vdwg.mxu0
        %v1607 = vld [vmem:[#allocation13] sm:$0xff]
        %v1608 = vld [vmem:[#allocation13 + $0x8] sm:$0xff]
        %v1609 = vld [vmem:[#allocation13 + $0x10] sm:$0xff]
        %v1610 = vld [vmem:[#allocation13 + $0x18] sm:$0xff]
        %v1611 = vld [vmem:[%s8] sm:$0x1]
        %v1613 = vlaneseq
        %v1614 = vshrl.u32 %v1613, 7
        %v1615 = vsub.s32 0, %v1614
        %v1616 = vrot.slane %v1611, %v1615
        %1618 = vmatprep.subr.mxu0 0.0
        %1619 = vmatpush1.msra.mxu0 %v1607
        %1620 = vmatprep.subr.mxu0 0.0
        %1621 = vmatpush1.msra.mxu0 %v1608
        %1622 = vmatprep.subr.mxu0 0.0
        %1623 = vmatpush1.msra.mxu0 %v1609
        %1624 = vmatprep.subr.mxu0 0.0
        %1625 = vmatpush1.msra.mxu0 %v1610
        %1626 = vmatprep.subr.mxu0 0.0
        %1627 = vmatpush1.msra.mxu0 0.0
        %1628 = vmatprep.subr.mxu0 0.0
        %1629 = vmatpush1.msra.mxu0 0.0
        %1630 = vmatprep.subr.mxu0 0.0
        %1631 = vmatpush1.msra.mxu0 0.0
        %1632 = vmatprep.subr.mxu0 0.0
        %1633 = vmatpush1.msra.mxu0 0.0
        %1634 = vmatprep.subr.mxu0 0.0
        %1635 = vmatpush1.msra.mxu0 0.0
        %1636 = vmatprep.subr.mxu0 0.0
        %1637 = vmatpush1.msra.mxu0 0.0
        %1638 = vmatprep.subr.mxu0 0.0
        %1639 = vmatpush1.msra.mxu0 0.0
        %1640 = vmatprep.subr.mxu0 0.0
        %1641 = vmatpush1.msra.mxu0 0.0
        %1642 = vmatprep.subr.mxu0 0.0
        %1643 = vmatpush1.msra.mxu0 0.0
        %1644 = vmatprep.subr.mxu0 0.0
        %1645 = vmatpush1.msra.mxu0 0.0
        %1646 = vmatprep.subr.mxu0 0.0
        %1647 = vmatpush1.msra.mxu0 0.0
        %1648 = vmatprep.subr.mxu0 0.0
        %1649 = vmatpush1.msra.mxu0 0.0
        %1650 = vmatprep.subr.mxu0 0.0
        %1651 = vmatpush1.msra.mxu0 0.0
        %1652 = vmatprep.subr.mxu0 0.0
        %1653 = vmatpush1.msra.mxu0 0.0
        %1654 = vmatprep.subr.mxu0 0.0
        %1655 = vmatpush1.msra.mxu0 0.0
        %1656 = vmatprep.subr.mxu0 0.0
        %1657 = vmatpush1.msra.mxu0 0.0
        %1658 = vmatprep.subr.mxu0 0.0
        %1659 = vmatpush1.msra.mxu0 0.0
        %1660 = vmatprep.subr.mxu0 0.0
        %1661 = vmatpush1.msra.mxu0 0.0
        %1662 = vmatprep.subr.mxu0 0.0
        %1663 = vmatpush1.msra.mxu0 0.0
        %1664 = vmatprep.subr.mxu0 0.0
        %1665 = vmatpush1.msra.mxu0 0.0
        %1666 = vmatprep.subr.mxu0 0.0
        %1667 = vmatpush1.msra.mxu0 0.0
        %1668 = vmatprep.subr.mxu0 0.0
        %1669 = vmatpush1.msra.mxu0 0.0
        %1670 = vmatprep.subr.mxu0 0.0
        %1671 = vmatpush1.msra.mxu0 0.0
        %1672 = vmatprep.subr.mxu0 0.0
        %1673 = vmatpush1.msra.mxu0 0.0
        %1674 = vmatprep.subr.mxu0 0.0
        %1675 = vmatpush1.msra.mxu0 0.0
        %1676 = vmatprep.subr.mxu0 0.0
        %1677 = vmatpush1.msra.mxu0 0.0
        %1678 = vmatprep.subr.mxu0 0.0
        %1679 = vmatpush1.msra.mxu0 0.0
        %1680 = vmatprep.subr.mxu0 0.0
        %1681 = vmatpush1.msra.mxu0 0.0
        %1682 = vmatprep.mubr.f32.mxu0 0.0
        %1683 = vmatmul.mubr.f32.gmra.mrb[0].mxu0 %v1527
        %v1684 = vpop.f32.mrb[0].mxu0
        %v1685 = vadd.f32 %v1616, %v1684
        %v1686 = vpop.f32.mrb[0].mxu0
        %1687 = vmatprep.mubr.f32.mxu0 0.0
        %1688 = vmatmul.mubr.f32.gmra.mrb[0].mxu0 %v1530
        %v1689 = vpop.f32.mrb[0].mxu0
        %v1690 = vadd.f32 %v1616, %v1689
        %v1691 = vpop.f32.mrb[0].mxu0
        %1692 = vdwg.mxu0
        %v1693 = vxor.u32 %v1685, 2147483648
        %v1694 = vxor.u32 %v1690, 2147483648
        %v1695 = vmul.f32 %v1693, 1.442695
        %v1696 = vpow.pop %v1695
        %v1697 = vmul.f32 %v1694, 1.442695
        %v1698 = vpow.pop %v1697
        %v1699 = vadd.f32 %v1696, 1.0
        %v1700 = vadd.f32 %v1698, 1.0
        %v1701 = vrcp.pop %v1699
        %v1702 = vmul.f32 1.0, %v1701
        %v1703 = vrcp.pop %v1700
        %v1704 = vmul.f32 1.0, %v1703
        %v1705 = vmul.f32 %v1599, %v1702
        %v1706 = vmul.f32 %v1604, %v1704
        %1707 = vst.msk [vmem:[%s437] sm:$0xff] %vm448, %v1705
        %1708 = vst.msk [vmem:[%s437 + $0x8] sm:$0xff] %vm448, %v1706
        %s1709 = sand.u32 %s231, 1
        %s1710 = scalar_lea.sflag [#allocation4], %s1709
        %s1711 = sand.u32 %s231, 1
        %s1712 = smul.addr %s1711, 16
        %s1713 = scalar_lea.vmem [#allocation14], %s1712
        // Predicated region
        $region85: #{tpu_custom_call.1} parent=55 // pred_check
          %p1714 = pneg %p241
        $region86: #{tpu_custom_call.1} parent=55 // pred_check_branch
          %1716 = sbr.rel (%p1714) target = $region88
        $region87: #{tpu_custom_call.1} parent=55 // pred_region
          %s1718 = ssub.s32 256, 256
          %1719 = vsyncadd %s1710, %s1718
          %s1720 = smul.addr %s29, 2
          %s1721 = smul.addr %s1720, 128
          %s1722 = scalar_lea.hbm %s9, %s1721
          %s1723 = sshll.u32 %s1713, 4
          %s1724 = int_to_ptr.vmem [resolvable:$true] %s1723
          %1729 = dma.vmem_to_hbm [thread:$0]  %s1724, 256, %s1722, %s1710, 128, 128, 8
        $region88: #{tpu_custom_call.1} parent=55 // pred_fallthru
          _
      $region56: #{tpu_custom_call.1} parent=5 // pred_fallthru
        _
      %p1730 = scmp.le.s32.totalorder 2, %s24
      // Predicated region
      $region89: #{tpu_custom_call.1} parent=5 // pred_check
        %p1731 = pneg %p1730
      $region90: #{tpu_custom_call.1} parent=5 // pred_check_branch
        %1733 = sbr.rel (%p1731) target = $region92
      $region91: #{tpu_custom_call.1} parent=5 // pred_region
        %s1734 = ssub.s32 %s24, 2
        // Predicated region
        $region93: #{tpu_custom_call.1} parent=91 // pred_check
          %p1735 = pneg %p247
        $region94: #{tpu_custom_call.1} parent=91 // pred_check_branch
          %1737 = sbr.rel (%p1735) target = $region96
        $region95: #{tpu_custom_call.1} parent=91 // pred_region
          %s1738 = sand.u32 %s232, 1
          %s1739 = scalar_lea.sflag [#allocation4], %s1738
          %s1740 = sand.u32 %s232, 1
          %s1741 = smul.addr %s1740, 16
          %s1742 = scalar_lea.vmem [#allocation14], %s1741
          %1743 = dma.done %s1739, 256
        $region96: #{tpu_custom_call.1} parent=91 // pred_fallthru
          _
      $region92: #{tpu_custom_call.1} parent=5 // pred_fallthru
        _
    $region6: #{tpu_custom_call.1} parent=1 // loop_footer
      %s28 = sadd.s32 1, %s24
    $region7: #{tpu_custom_call.1} parent=1 // loop_footer_branch
      %23 = sbr.rel target = $region3
    $region8: #{tpu_custom_call.1} parent=1 // loop_exit
      _
    %1744 = vsyncpa [#allocation3], 1
    %s1745 = scalar_lea.sflag [#allocation3], 1
    %1746 = vsyncpa %s1745, 1
    %1747 = vsyncpa [#allocation6], 1
    %1748 = vsyncpa [#allocation9], 1
    %1749 = vsyncpa [#allocation12], 1
    %1750 = vsyncpa [#allocation4], 1
    %s1751 = scalar_lea.sflag [#allocation4], 1
    %1752 = vsyncpa %s1751, 1

</llo_original>
